<compile_context>
chip_gen: v5e
topology: v5e:2x2
jax: 0.10.0
libtpu: 0.0.40
codegen_flags: <defaults>
</compile_context>

<pallas_src>
import jax
import jax.numpy as jnp
from jax.experimental import pallas as pl
from jax.experimental.pallas import tpu as pltpu

LANE = 128                 # lane-dense padding for hidden / classifier output
MB = 1024 * 1024
_VMEM_CAP = 48 * MB        # stay well under v7x's 64 MiB physical VMEM per TC
_VMEM_FLOOR = 32 * MB
_FUSE_BUDGET = 24 * MB     # fused single-pass-over-A path only for small graphs


def _round_up(x, m):
    return ((x + m - 1) // m) * m


# --------------------------------------------------------------------------
# Fused kernel (small graphs): A resident, read once; no HBM intermediates.
# --------------------------------------------------------------------------
def _gcn_fused_kernel(a_ref, h_ref, w12_ref, b1_ref, w2b_ref, b2_ref,
                      w3_ref, b3_ref, out_ref):
    hp = b1_ref.shape[-1]
    a = a_ref[...].astype(jnp.bfloat16)                      # in-kernel cast (free, mem-bound)
    ah = jnp.dot(a, h_ref[...].astype(jnp.bfloat16),
                 preferred_element_type=jnp.float32)
    z = jnp.dot(ah.astype(jnp.bfloat16), w12_ref[...],
                preferred_element_type=jnp.float32)          # [x1_pre | partial2]
    x1 = jnp.maximum(z[:, :hp] + b1_ref[...], 0.0)
    p2 = z[:, hp:]
    ax1 = jnp.dot(a, x1.astype(jnp.bfloat16),
                  preferred_element_type=jnp.float32)
    x2 = jnp.maximum(
        jnp.dot(ax1.astype(jnp.bfloat16), w2b_ref[...],
                preferred_element_type=jnp.float32) + p2 + b2_ref[...], 0.0)
    logits = jnp.dot(x2.astype(jnp.bfloat16), w3_ref[...],
                     preferred_element_type=jnp.float32) + b3_ref[...]
    # padded lanes carry a -1e30 bias -> exp underflows to 0, softmax ignores them
    m = jnp.max(logits, axis=-1, keepdims=True)
    e = jnp.exp(logits - m)
    out_ref[...] = e * pl.reciprocal(jnp.sum(e, axis=-1, keepdims=True),
                                     approx=True)


# --------------------------------------------------------------------------
# Tiled stage 1:  ah = A[tile] @ H ;  [x1_pre | partial2] = ah @ [W1 | W2_top]
#                 x1 = ReLU(x1_pre + b1)   (bf16, feeds the second A-hop)
#                 partial2 stored bf16     (halves its HBM round trip)
# --------------------------------------------------------------------------
def _gcn_stage1_kernel(a_ref, h_ref, w12_ref, b1_ref, x1_ref, p2_ref):
    hp = b1_ref.shape[-1]
    a = a_ref[...].astype(jnp.bfloat16)
    ah = jnp.dot(a, h_ref[...].astype(jnp.bfloat16),
                 preferred_element_type=jnp.float32)
    z = jnp.dot(ah.astype(jnp.bfloat16), w12_ref[...],
                preferred_element_type=jnp.float32)
    x1_ref[...] = jnp.maximum(z[:, :hp] + b1_ref[...], 0.0).astype(x1_ref.dtype)
    p2_ref[...] = z[:, hp:].astype(p2_ref.dtype)


# --------------------------------------------------------------------------
# Tiled stage 2:  x2 = ReLU((A[tile] @ x1) @ W2_bot + partial2 + b2)
#                 out = softmax(x2 @ W3_pad + b3_pad)
# --------------------------------------------------------------------------
def _gcn_stage2_kernel(a_ref, x1_ref, p2_ref, w2b_ref, b2_ref, w3_ref, b3_ref,
                       out_ref):
    a = a_ref[...].astype(jnp.bfloat16)
    ax1 = jnp.dot(a, x1_ref[...], preferred_element_type=jnp.float32)
    x2 = jnp.dot(ax1.astype(jnp.bfloat16), w2b_ref[...],
                 preferred_element_type=jnp.float32)
    x2 = jnp.maximum(x2 + p2_ref[...].astype(jnp.float32) + b2_ref[...], 0.0)
    logits = jnp.dot(x2.astype(jnp.bfloat16), w3_ref[...],
                     preferred_element_type=jnp.float32) + b3_ref[...]
    m = jnp.max(logits, axis=-1, keepdims=True)
    e = jnp.exp(logits - m)
    out_ref[...] = e * pl.reciprocal(jnp.sum(e, axis=-1, keepdims=True),
                                     approx=True)


def _pick_tile(n):
    """Biggest row tile <= min(512, n//2) that divides n.

    Prefers multiples of 16 (bf16 sublane packing for the x1 tile) and keeps
    >= 2 grid steps so the 'parallel' axis is split across v7x's two
    TensorCores; single-TC v5e/v6e just get the biggest tile that fits (raises
    achieved HBM roofline fraction)."""
    hi = min(512, n // 2)
    for tm in range(hi, 15, -1):
        if n % tm == 0 and tm % 16 == 0:
            return tm
    for tm in range(hi, 7, -1):
        if n % tm == 0 and tm % 8 == 0:
            return tm
    return n


def gcn_forward(norm_a, node_feature, params, *, tm=None, fuse=None):
    """Pallas-backed GCN.forward (returns only the softmax output; loss=None)."""
    w1, b1, w2, b2, w3, b3 = params
    n = norm_a.shape[0]
    f = node_feature.shape[1]
    hidden = w1.shape[1]
    label_num = w3.shape[1]
    hp = _round_up(hidden, LANE)          # lane-aligned hidden width
    bf16 = jnp.bfloat16

    # Stream A / H as f32; cast to bf16 inside the kernels (skips a host pre-pass).
    a32 = norm_a.astype(jnp.float32)
    h32 = node_feature.astype(jnp.float32)

    # Zero-padded, lane-aligned weights.  Padded x1/p2/x2 columns stay exactly 0
    # through the ReLUs and padded W3 rows are 0, so results are unchanged.
    w1p = jnp.zeros((f, hp), jnp.float32).at[:, :hidden].set(w1)
    w2top = jnp.zeros((f, hp), jnp.float32).at[:, :hidden].set(w2[:f])
    w12 = jnp.concatenate([w1p, w2top], axis=1).astype(bf16)        # [W1 | W2_top]
    b1p = jnp.zeros((1, hp), jnp.float32).at[:, :hidden].set(b1)
    w2bot = jnp.zeros((hp, hp), jnp.float32).at[:hidden, :hidden].set(
        w2[f:]).astype(bf16)
    b2p = jnp.zeros((1, hp), jnp.float32).at[:, :hidden].set(b2)
    # Lane-dense padded classifier head: zero weight cols, -1e30 bias in pad lanes
    # (logits stay f32, so the mask trick is safe).
    w3p = jnp.zeros((hp, LANE), bf16).at[:hidden, :label_num].set(w3.astype(bf16))
    b3p = jnp.full((1, LANE), -1e30, jnp.float32).at[:, :label_num].set(
        b3.astype(jnp.float32))

    weights_bytes = 2 * f * 2 * hp + 2 * hp * hp + 2 * hp * LANE + 4 * (2 * hp + LANE)

    # Fused path footprint (double-buffered blocks + in-kernel bf16 copies/temps).
    fused_bytes = (2 * (4 * n * n + 4 * n * f + 4 * n * LANE + weights_bytes)
                   + 2 * n * n + 2 * n * f
                   + 4 * n * f + 4 * n * 2 * hp + 3 * 4 * n * hp)
    if fuse is None:
        fuse = fused_bytes <= _FUSE_BUDGET

    if fuse:
        # -------- fused single-call path: A read from HBM exactly once --------
        cparams = pltpu.CompilerParams(
            dimension_semantics=("arbitrary",),
            vmem_limit_bytes=int(min(_VMEM_CAP, max(_VMEM_FLOOR, 2 * fused_bytes))),
        )
        cost = pl.CostEstimate(
            flops=(2 * n * n * f + 2 * n * f * 2 * hp + 2 * n * n * hp
                   + 2 * n * hp * hp + 2 * n * hp * LANE),
            transcendentals=n * LANE,
            bytes_accessed=4 * n * n + 4 * n * f + weights_bytes + 4 * n * LANE,
        )
        out_padded = pl.pallas_call(
            _gcn_fused_kernel,
            out_shape=jax.ShapeDtypeStruct((n, LANE), jnp.float32),
            grid_spec=pltpu.PrefetchScalarGridSpec(
                num_scalar_prefetch=0,
                grid=(1,),
                in_specs=[
                    pl.BlockSpec((n, n), lambda i: (0, 0)),         # A (resident, f32)
                    pl.BlockSpec((n, f), lambda i: (0, 0)),         # H
                    pl.BlockSpec((f, 2 * hp), lambda i: (0, 0)),    # [W1 | W2_top]
                    pl.BlockSpec((1, hp), lambda i: (0, 0)),        # b1
                    pl.BlockSpec((hp, hp), lambda i: (0, 0)),       # W2_bot
                    pl.BlockSpec((1, hp), lambda i: (0, 0)),        # b2
                    pl.BlockSpec((hp, LANE), lambda i: (0, 0)),     # W3 (padded)
                    pl.BlockSpec((1, LANE), lambda i: (0, 0)),      # b3 (padded)
                ],
                out_specs=pl.BlockSpec((n, LANE), lambda i: (0, 0)),
            ),
            compiler_params=cparams,
            cost_estimate=cost,
        )(a32, h32, w12, b1p, w2bot, b2p, w3p, b3p)
        return out_padded[:, :label_num]

    # ---------------- tiled two-stage path (A streamed twice) ----------------
    if tm is None:
        tm = _pick_tile(n)
    assert n % tm == 0, f"N={n} must be divisible by row tile tm={tm}"
    grid = (n // tm,)

    s1_bytes = (2 * (4 * tm * n + 4 * n * f + 2 * f * 2 * hp + 4 * hp
                     + 2 * tm * hp + 2 * tm * hp)
                + 2 * tm * n + 2 * n * f + 4 * tm * f + 4 * tm * 2 * hp)
    s2_bytes = (2 * (4 * tm * n + 2 * n * hp + 2 * tm * hp + 2 * hp * hp + 4 * hp
                     + 2 * hp * LANE + 4 * LANE + 4 * tm * LANE)
                + 2 * tm * n + 8 * tm * hp + 4 * tm * LANE)
    vmem_limit = int(min(_VMEM_CAP, max(_VMEM_FLOOR, 2 * max(s1_bytes, s2_bytes))))
    cparams = pltpu.CompilerParams(
        dimension_semantics=("parallel",),      # row tiles split across TensorCores
        vmem_limit_bytes=vmem_limit,
    )

    # ---------------- stage 1 ----------------
    s1_cost = pl.CostEstimate(
        flops=2 * n * n * f + 2 * n * f * 2 * hp,
        transcendentals=0,
        bytes_accessed=4 * n * n + 4 * n * f + 2 * f * 2 * hp + 4 * hp
        + 2 * 2 * n * hp,
    )
    x1, p2 = pl.pallas_call(
        _gcn_stage1_kernel,
        out_shape=(
            jax.ShapeDtypeStruct((n, hp), bf16),
            jax.ShapeDtypeStruct((n, hp), bf16),
        ),
        grid_spec=pltpu.PrefetchScalarGridSpec(
            num_scalar_prefetch=0,
            grid=grid,
            in_specs=[
                pl.BlockSpec((tm, n), lambda i: (i, 0)),            # A row tile (streamed)
                pl.BlockSpec((n, f), lambda i: (0, 0)),             # H (resident)
                pl.BlockSpec((f, 2 * hp), lambda i: (0, 0)),        # [W1 | W2_top]
                pl.BlockSpec((1, hp), lambda i: (0, 0)),            # b1
            ],
            out_specs=(
                pl.BlockSpec((tm, hp), lambda i: (i, 0)),           # x1 tile (bf16)
                pl.BlockSpec((tm, hp), lambda i: (i, 0)),           # partial2 tile (bf16)
            ),
        ),
        compiler_params=cparams,
        cost_estimate=s1_cost,
    )(a32, h32, w12, b1p)

    # ---------------- stage 2 ----------------
    s2_cost = pl.CostEstimate(
        flops=2 * n * n * hp + 2 * n * hp * hp + 2 * n * hp * LANE,
        transcendentals=n * LANE,
        bytes_accessed=4 * n * n + 4 * n * hp + 2 * hp * hp + 2 * hp * LANE
        + 4 * (hp + LANE) + 4 * n * LANE,
    )
    out_padded = pl.pallas_call(
        _gcn_stage2_kernel,
        out_shape=jax.ShapeDtypeStruct((n, LANE), jnp.float32),
        grid_spec=pltpu.PrefetchScalarGridSpec(
            num_scalar_prefetch=0,
            grid=grid,
            in_specs=[
                pl.BlockSpec((tm, n), lambda i: (i, 0)),            # A row tile (streamed)
                pl.BlockSpec((n, hp), lambda i: (0, 0)),            # x1 (resident, bf16)
                pl.BlockSpec((tm, hp), lambda i: (i, 0)),           # partial2 tile (bf16)
                pl.BlockSpec((hp, hp), lambda i: (0, 0)),           # W2_bot
                pl.BlockSpec((1, hp), lambda i: (0, 0)),            # b2
                pl.BlockSpec((hp, LANE), lambda i: (0, 0)),         # W3 (padded)
                pl.BlockSpec((1, LANE), lambda i: (0, 0)),          # b3 (padded)
            ],
            out_specs=pl.BlockSpec((tm, LANE), lambda i: (i, 0)),
        ),
        compiler_params=cparams,
        cost_estimate=s2_cost,
    )(a32, x1, p2, w2bot, b2p, w3p, b3p)

    return out_padded[:, :label_num]


# --------------------------------------------------------------------------
# Parameter init (mimics torch.nn.Linear default U(-1/sqrt(fan_in), ...)),
# pure-JAX reference, and a self-test of BOTH code paths.
# --------------------------------------------------------------------------
def _uniform(key, shape, bound):
    return jax.random.uniform(key, shape, jnp.float32, minval=-bound, maxval=bound)


def init_params(key, node_size, label_num):
    hidden = node_size // 2
    k = jax.random.split(key, 6)
    b1v = 1.0 / (node_size ** 0.5)
    w1 = _uniform(k[0], (node_size, hidden), b1v)           # gcn1.linear (transposed)
    b1 = _uniform(k[1], (1, hidden), b1v)
    fan2 = node_size + hidden
    b2v = 1.0 / (fan2 ** 0.5)
    w2 = _uniform(k[2], (fan2, hidden), b2v)                 # gcn2.linear (transposed)
    b2 = _uniform(k[3], (1, hidden), b2v)
    b3v = 1.0 / (hidden ** 0.5)
    w3 = _uniform(k[4], (hidden, label_num), b3v)            # final linear (transposed)
    b3 = _uniform(k[5], (1, label_num), b3v)
    return (w1, b1, w2, b2, w3, b3)


def gcn_reference(norm_a, node_feature, params):
    """Plain-JAX f32 reference matching the PyTorch forward semantics."""
    w1, b1, w2, b2, w3, b3 = params
    x = jnp.maximum(norm_a @ node_feature @ w1 + b1, 0.0)
    x = jnp.concatenate([node_feature, x], axis=1)
    x = jnp.maximum(norm_a @ x @ w2 + b2, 0.0)
    x = x @ w3 + b3
    return jax.nn.softmax(x, axis=1)


if __name__ == "__main__":
    # Second config exercises hidden % 128 != 0 (lane padding) and tm=96 tiles.
    configs = [(256, 4), (192, 6)]           # (node_size == N == F, label_num)

    key = jax.random.PRNGKey(0)
    for node_size, label_num in configs:
        key, ka, kh, kp = jax.random.split(key, 4)

        raw_a = jax.random.uniform(ka, (node_size, node_size), jnp.float32)
        norm_a = raw_a / jnp.sum(raw_a, axis=1, keepdims=True)
        node_feature = jax.random.normal(kh, (node_size, node_size), jnp.float32)
        params = init_params(kp, node_size, label_num)

        ref = gcn_reference(norm_a, node_feature, params)

        for fuse in (True, False):           # validate both the fused and tiled paths
            out = gcn_forward(norm_a, node_feature, params, fuse=fuse)
            out = jax.block_until_ready(out)
            assert out.shape == (node_size, label_num)
            max_err = float(jnp.max(jnp.abs(out - ref)))
            # bf16 inputs / f32 accumulation -> loose tolerance vs. the f32 reference
            assert max_err < 3e-2, (
                f"N={node_size} fuse={fuse}: mismatch vs reference "
                f"(max abs err {max_err})")

    print("KERNEL_OK")
</pallas_src>

<mosaic_0001>
module attributes {stable_mosaic.version = 11 : i64} {
  func.func @_gcn_fused_kernel(%arg0: i32, %arg1: memref<256x256xf32, #tpu.memory_space<vmem>>, %arg2: memref<256x256xf32, #tpu.memory_space<vmem>>, %arg3: memref<256x256xbf16, #tpu.memory_space<vmem>>, %arg4: memref<1x128xf32, #tpu.memory_space<vmem>>, %arg5: memref<128x128xbf16, #tpu.memory_space<vmem>>, %arg6: memref<1x128xf32, #tpu.memory_space<vmem>>, %arg7: memref<128x128xbf16, #tpu.memory_space<vmem>>, %arg8: memref<1x128xf32, #tpu.memory_space<vmem>>, %arg9: memref<256x128xf32, #tpu.memory_space<vmem>>) attributes {dimension_semantics = [#tpu.dimension_semantics<arbitrary>], iteration_bounds = array<i64: 1>, scalar_prefetch = 0 : i64, scratch_operands = 0 : i64, tpu.core_type = #tpu.core_type<tc>, window_params = [{pipeline_mode = #tpu.pipeline_mode<synchronous>, transform_indices = @transform_0, window_bounds = array<i64: 256, 256>}, {pipeline_mode = #tpu.pipeline_mode<synchronous>, transform_indices = @transform_1, window_bounds = array<i64: 256, 256>}, {pipeline_mode = #tpu.pipeline_mode<synchronous>, transform_indices = @transform_2, window_bounds = array<i64: 256, 256>}, {pipeline_mode = #tpu.pipeline_mode<synchronous>, transform_indices = @transform_3, window_bounds = array<i64: 1, 128>}, {pipeline_mode = #tpu.pipeline_mode<synchronous>, transform_indices = @transform_4, window_bounds = array<i64: 128, 128>}, {pipeline_mode = #tpu.pipeline_mode<synchronous>, transform_indices = @transform_5, window_bounds = array<i64: 1, 128>}, {pipeline_mode = #tpu.pipeline_mode<synchronous>, transform_indices = @transform_6, window_bounds = array<i64: 128, 128>}, {pipeline_mode = #tpu.pipeline_mode<synchronous>, transform_indices = @transform_7, window_bounds = array<i64: 1, 128>}, {pipeline_mode = #tpu.pipeline_mode<synchronous>, transform_indices = @transform_8, window_bounds = array<i64: 256, 128>}]} {
    %c0 = arith.constant 0 : index
    %c0_0 = arith.constant 0 : index
    %0 = vector.load %arg1[%c0, %c0_0] : memref<256x256xf32, #tpu.memory_space<vmem>>, vector<256x256xf32>
    %1 = arith.truncf %0 : vector<256x256xf32> to vector<256x256xbf16>
    %c0_1 = arith.constant 0 : index
    %c0_2 = arith.constant 0 : index
    %2 = vector.load %arg2[%c0_1, %c0_2] : memref<256x256xf32, #tpu.memory_space<vmem>>, vector<256x256xf32>
    %3 = arith.truncf %2 : vector<256x256xf32> to vector<256x256xbf16>
    %cst = arith.constant dense<0.000000e+00> : vector<256x256xf32>
    %4 = tpu.matmul %1, %3, %cst {dimension_numbers = #tpu.dot_dimension_numbers<[1], [0], [0], [1], [0, 0, 1, 1], [], []>} : vector<256x256xbf16>, vector<256x256xbf16>, vector<256x256xf32> -> vector<256x256xf32>
    %5 = arith.truncf %4 : vector<256x256xf32> to vector<256x256xbf16>
    %c0_3 = arith.constant 0 : index
    %c0_4 = arith.constant 0 : index
    %6 = vector.load %arg3[%c0_3, %c0_4] : memref<256x256xbf16, #tpu.memory_space<vmem>>, vector<256x256xbf16>
    %cst_5 = arith.constant dense<0.000000e+00> : vector<256x256xf32>
    %7 = tpu.matmul %5, %6, %cst_5 {dimension_numbers = #tpu.dot_dimension_numbers<[1], [0], [0], [1], [0, 0, 1, 1], [], []>} : vector<256x256xbf16>, vector<256x256xbf16>, vector<256x256xf32> -> vector<256x256xf32>
    %8 = vector.extract_strided_slice %7 {offsets = [0, 0], sizes = [256, 128], strides = [1, 1]} : vector<256x256xf32> to vector<256x128xf32>
    %c0_6 = arith.constant 0 : index
    %c0_7 = arith.constant 0 : index
    %9 = vector.load %arg4[%c0_6, %c0_7] : memref<1x128xf32, #tpu.memory_space<vmem>>, vector<1x128xf32>
    %10 = vector.broadcast %9 : vector<1x128xf32> to vector<256x128xf32>
    %11 = arith.addf %8, %10 : vector<256x128xf32>
    %cst_8 = arith.constant 0.000000e+00 : f32
    %12 = vector.broadcast %cst_8 : f32 to vector<256x128xf32>
    %13 = arith.maximumf %11, %12 : vector<256x128xf32>
    %14 = vector.extract_strided_slice %7 {offsets = [0, 128], sizes = [256, 128], strides = [1, 1]} : vector<256x256xf32> to vector<256x128xf32>
    %15 = arith.truncf %13 : vector<256x128xf32> to vector<256x128xbf16>
    %cst_9 = arith.constant dense<0.000000e+00> : vector<256x128xf32>
    %16 = tpu.matmul %1, %15, %cst_9 {dimension_numbers = #tpu.dot_dimension_numbers<[1], [0], [0], [1], [0, 0, 1, 1], [], []>} : vector<256x256xbf16>, vector<256x128xbf16>, vector<256x128xf32> -> vector<256x128xf32>
    %17 = arith.truncf %16 : vector<256x128xf32> to vector<256x128xbf16>
    %c0_10 = arith.constant 0 : index
    %c0_11 = arith.constant 0 : index
    %18 = vector.load %arg5[%c0_10, %c0_11] : memref<128x128xbf16, #tpu.memory_space<vmem>>, vector<128x128xbf16>
    %cst_12 = arith.constant dense<0.000000e+00> : vector<256x128xf32>
    %19 = tpu.matmul %17, %18, %cst_12 {dimension_numbers = #tpu.dot_dimension_numbers<[1], [0], [0], [1], [0, 0, 1, 1], [], []>} : vector<256x128xbf16>, vector<128x128xbf16>, vector<256x128xf32> -> vector<256x128xf32>
    %20 = arith.addf %19, %14 : vector<256x128xf32>
    %c0_13 = arith.constant 0 : index
    %c0_14 = arith.constant 0 : index
    %21 = vector.load %arg6[%c0_13, %c0_14] : memref<1x128xf32, #tpu.memory_space<vmem>>, vector<1x128xf32>
    %22 = vector.broadcast %21 : vector<1x128xf32> to vector<256x128xf32>
    %23 = arith.addf %20, %22 : vector<256x128xf32>
    %cst_15 = arith.constant 0.000000e+00 : f32
    %24 = vector.broadcast %cst_15 : f32 to vector<256x128xf32>
    %25 = arith.maximumf %23, %24 : vector<256x128xf32>
    %26 = arith.truncf %25 : vector<256x128xf32> to vector<256x128xbf16>
    %c0_16 = arith.constant 0 : index
    %c0_17 = arith.constant 0 : index
    %27 = vector.load %arg7[%c0_16, %c0_17] : memref<128x128xbf16, #tpu.memory_space<vmem>>, vector<128x128xbf16>
    %cst_18 = arith.constant dense<0.000000e+00> : vector<256x128xf32>
    %28 = tpu.matmul %26, %27, %cst_18 {dimension_numbers = #tpu.dot_dimension_numbers<[1], [0], [0], [1], [0, 0, 1, 1], [], []>} : vector<256x128xbf16>, vector<128x128xbf16>, vector<256x128xf32> -> vector<256x128xf32>
    %c0_19 = arith.constant 0 : index
    %c0_20 = arith.constant 0 : index
    %29 = vector.load %arg8[%c0_19, %c0_20] : memref<1x128xf32, #tpu.memory_space<vmem>>, vector<1x128xf32>
    %30 = vector.broadcast %29 : vector<1x128xf32> to vector<256x128xf32>
    %31 = arith.addf %28, %30 : vector<256x128xf32>
    %cst_21 = arith.constant dense<0xFF800000> : vector<256xf32>
    %32 = vector.multi_reduction <maximumf>, %31, %cst_21 [1] : vector<256x128xf32> to vector<256xf32>
    %33 = vector.shape_cast %32 : vector<256xf32> to vector<256x1xf32>
    %34 = vector.broadcast %33 : vector<256x1xf32> to vector<256x128xf32>
    %35 = arith.subf %31, %34 : vector<256x128xf32>
    %36 = math.exp %35 : vector<256x128xf32>
    %cst_22 = arith.constant dense<0.000000e+00> : vector<256xf32>
    %37 = vector.multi_reduction <add>, %36, %cst_22 [1] : vector<256x128xf32> to vector<256xf32>
    %38 = vector.shape_cast %37 : vector<256xf32> to vector<256x1xf32>
    %39 = tpu.reciprocal %38 {approx = true} : vector<256x1xf32> -> vector<256x1xf32>
    %40 = vector.broadcast %39 : vector<256x1xf32> to vector<256x128xf32>
    %41 = arith.mulf %36, %40 : vector<256x128xf32>
    %c0_23 = arith.constant 0 : index
    %c0_24 = arith.constant 0 : index
    %42 = vector.load %arg9[%c0_23, %c0_24] : memref<256x128xf32, #tpu.memory_space<vmem>>, vector<256x128xf32>
    tpu.vector_store %arg9[%c0_23, %c0_24], %41 {strides = array<i32>} : memref<256x128xf32, #tpu.memory_space<vmem>>, vector<256x128xf32>,
    return
  }
  func.func @transform_0(%arg0: i32) -> (i32, i32) {
    %c0_i32 = arith.constant 0 : i32
    %c0_i32_0 = arith.constant 0 : i32
    %c0_i32_1 = arith.constant 0 : i32
    return %c0_i32, %c0_i32_0 : i32, i32
  }
  func.func @transform_1(%arg0: i32) -> (i32, i32) {
    %c0_i32 = arith.constant 0 : i32
    %c0_i32_0 = arith.constant 0 : i32
    %c0_i32_1 = arith.constant 0 : i32
    return %c0_i32, %c0_i32_0 : i32, i32
  }
  func.func @transform_2(%arg0: i32) -> (i32, i32) {
    %c0_i32 = arith.constant 0 : i32
    %c0_i32_0 = arith.constant 0 : i32
    %c0_i32_1 = arith.constant 0 : i32
    return %c0_i32, %c0_i32_0 : i32, i32
  }
  func.func @transform_3(%arg0: i32) -> (i32, i32) {
    %c0_i32 = arith.constant 0 : i32
    %c0_i32_0 = arith.constant 0 : i32
    %c0_i32_1 = arith.constant 0 : i32
    return %c0_i32, %c0_i32_0 : i32, i32
  }
  func.func @transform_4(%arg0: i32) -> (i32, i32) {
    %c0_i32 = arith.constant 0 : i32
    %c0_i32_0 = arith.constant 0 : i32
    %c0_i32_1 = arith.constant 0 : i32
    return %c0_i32, %c0_i32_0 : i32, i32
  }
  func.func @transform_5(%arg0: i32) -> (i32, i32) {
    %c0_i32 = arith.constant 0 : i32
    %c0_i32_0 = arith.constant 0 : i32
    %c0_i32_1 = arith.constant 0 : i32
    return %c0_i32, %c0_i32_0 : i32, i32
  }
  func.func @transform_6(%arg0: i32) -> (i32, i32) {
    %c0_i32 = arith.constant 0 : i32
    %c0_i32_0 = arith.constant 0 : i32
    %c0_i32_1 = arith.constant 0 : i32
    return %c0_i32, %c0_i32_0 : i32, i32
  }
  func.func @transform_7(%arg0: i32) -> (i32, i32) {
    %c0_i32 = arith.constant 0 : i32
    %c0_i32_0 = arith.constant 0 : i32
    %c0_i32_1 = arith.constant 0 : i32
    return %c0_i32, %c0_i32_0 : i32, i32
  }
  func.func @transform_8(%arg0: i32) -> (i32, i32) {
    %c0_i32 = arith.constant 0 : i32
    %c0_i32_0 = arith.constant 0 : i32
    %c0_i32_1 = arith.constant 0 : i32
    return %c0_i32, %c0_i32_0 : i32, i32
  }
}

</mosaic_0001>

<llo_original>
// kernel: tpu_custom_call.1
$region0: #{tpu_custom_call.1}
  #allocation0 [shape = 'u32[]', space=smem, size = 0x4, offset = 0x4, fixed_abs, tag = 'smem constant byte address 0x4 - core index']
  #allocation1 [shape = 'u32[72,128]{1,0:T(1,128)}', space=vmem, size = 0x9000, scoped, tag = 'internal scratch']
  %s0 = inlined_call_operand.hbm [shape: f32[256,256], index: 0, kind: input, shape index: {}]
  %s1 = inlined_call_operand.hbm [shape: f32[256,256], index: 1, kind: input, shape index: {}]
  %s2 = inlined_call_operand.hbm [shape: bf16[256,256], index: 2, kind: input, shape index: {}]
  %s3 = inlined_call_operand.vmem [shape: f32[1,128], index: 3, kind: input, shape index: {}]
  %s4 = inlined_call_operand.hbm [shape: bf16[128,128], index: 4, kind: input, shape index: {}]
  %s5 = inlined_call_operand.vmem [shape: f32[1,128], index: 5, kind: input, shape index: {}]
  %s6 = inlined_call_operand.hbm [shape: bf16[128,128], index: 6, kind: input, shape index: {}]
  %s7 = inlined_call_operand.vmem [shape: f32[1,128], index: 7, kind: input, shape index: {}]
  %s8 = inlined_call_operand.hbm [shape: f32[256,128], index: 8, kind: output, shape index: {}]
  %s9 = sld [smem:[#allocation0]]
  $region62: #{tpu_custom_call.1} parent=0
    _
  %s11 = ssub.s32 1, %s9
  %s12 = scalar_select 0, %s11, %s9
  $region1: #{tpu_custom_call.1} parent=0
    #allocation2 [shape = 'u8[262144]{0}', space=vmem, size = 0x40000, scoped, tag = 'input window, operand 0, single buffered']
    #allocation3 [shape = 's32[1]{0}', space=sflag, size = 0x4, scoped, tag = 'scoped memory for tpu_custom_call.1']
    #allocation4 [shape = 's32[1]{0}', space=sflag, size = 0x4, scoped, tag = 'scoped memory for tpu_custom_call.1']
    #allocation5 [shape = 'u8[262144]{0}', space=vmem, size = 0x40000, scoped, tag = 'input window, operand 1, single buffered']
    #allocation6 [shape = 's32[1]{0}', space=sflag, size = 0x4, scoped, tag = 'scoped memory for tpu_custom_call.1']
    #allocation7 [shape = 'u8[131072]{0}', space=vmem, size = 0x20000, scoped, tag = 'input window, operand 2, single buffered']
    #allocation8 [shape = 'u8[32768]{0}', space=vmem, size = 0x8000, scoped, tag = 'input window, operand 4, single buffered']
    #allocation9 [shape = 's32[1]{0}', space=sflag, size = 0x4, scoped, tag = 'scoped memory for tpu_custom_call.1']
    #allocation10 [shape = 'u8[32768]{0}', space=vmem, size = 0x8000, scoped, tag = 'input window, operand 6, single buffered']
    #allocation11 [shape = 'u8[131072]{0}', space=vmem, size = 0x20000, scoped, tag = 'output window, operand 0, single buffered']
    %13 = vsyncpa [#allocation3], 0
    %14 = vsyncpa [#allocation6], 0
    %15 = vsyncpa [#allocation9], 0
    %16 = vsyncpa [#allocation4], 0
    // Predicated region
    $region2: #{tpu_custom_call.1} parent=1 // pred_check
      _
    $region3: #{tpu_custom_call.1} parent=1 // pred_check_branch
      %18 = sbr.rel (0) target = $region5
    $region4: #{tpu_custom_call.1} parent=1 // pred_region
      %20 = vsyncadd [#allocation3], 0
      %s21 = sshll.u32 %s0, 4
      %s22 = int_to_ptr.hbm [resolvable:$true] %s21
      %s23 = sshll.u32 [#allocation2], 4
      %s24 = int_to_ptr.vmem [resolvable:$true] %s23
      %29 = dma.hbm_to_vmem [thread:$0]  %s22, 8192, %s24, [#allocation3], 256, 256, 16
    $region5: #{tpu_custom_call.1} parent=1 // pred_fallthru
      _
    // Predicated region
    $region6: #{tpu_custom_call.1} parent=1 // pred_check
      _
    $region7: #{tpu_custom_call.1} parent=1 // pred_check_branch
      %31 = sbr.rel (0) target = $region9
    $region8: #{tpu_custom_call.1} parent=1 // pred_region
      %33 = vsyncadd [#allocation6], 0
      %s34 = sshll.u32 %s1, 4
      %s35 = int_to_ptr.hbm [resolvable:$true] %s34
      %s36 = sshll.u32 [#allocation5], 4
      %s37 = int_to_ptr.vmem [resolvable:$true] %s36
      %42 = dma.hbm_to_vmem [thread:$0]  %s35, 8192, %s37, [#allocation6], 256, 256, 16
    $region9: #{tpu_custom_call.1} parent=1 // pred_fallthru
      _
    // Predicated region
    $region10: #{tpu_custom_call.1} parent=1 // pred_check
      _
    $region11: #{tpu_custom_call.1} parent=1 // pred_check_branch
      %44 = sbr.rel (0) target = $region13
    $region12: #{tpu_custom_call.1} parent=1 // pred_region
      %46 = vsyncadd [#allocation6], 0
      %s47 = sshll.u32 %s2, 4
      %s48 = int_to_ptr.hbm [resolvable:$true] %s47
      %s49 = sshll.u32 [#allocation7], 4
      %s50 = int_to_ptr.vmem [resolvable:$true] %s49
      %55 = dma.hbm_to_vmem [thread:$0]  %s48, 4096, %s50, [#allocation6], 128, 128, 8
    $region13: #{tpu_custom_call.1} parent=1 // pred_fallthru
      _
    // Predicated region
    $region14: #{tpu_custom_call.1} parent=1 // pred_check
      _
    $region15: #{tpu_custom_call.1} parent=1 // pred_check_branch
      %57 = sbr.rel (0) target = $region17
    $region16: #{tpu_custom_call.1} parent=1 // pred_region
      _
    $region17: #{tpu_custom_call.1} parent=1 // pred_fallthru
      _
    // Predicated region
    $region18: #{tpu_custom_call.1} parent=1 // pred_check
      _
    $region19: #{tpu_custom_call.1} parent=1 // pred_check_branch
      %59 = sbr.rel (0) target = $region21
    $region20: #{tpu_custom_call.1} parent=1 // pred_region
      %61 = vsyncadd [#allocation9], 0
      %s62 = sshll.u32 %s4, 4
      %s63 = int_to_ptr.hbm [resolvable:$true] %s62
      %s64 = sshll.u32 [#allocation8], 4
      %s65 = int_to_ptr.vmem [resolvable:$true] %s64
      %70 = dma.hbm_to_vmem [thread:$0]  %s63, 1024, %s65, [#allocation9], 64, 64, 4
    $region21: #{tpu_custom_call.1} parent=1 // pred_fallthru
      _
    // Predicated region
    $region22: #{tpu_custom_call.1} parent=1 // pred_check
      _
    $region23: #{tpu_custom_call.1} parent=1 // pred_check_branch
      %72 = sbr.rel (0) target = $region25
    $region24: #{tpu_custom_call.1} parent=1 // pred_region
      _
    $region25: #{tpu_custom_call.1} parent=1 // pred_fallthru
      _
    // Predicated region
    $region26: #{tpu_custom_call.1} parent=1 // pred_check
      _
    $region27: #{tpu_custom_call.1} parent=1 // pred_check_branch
      %74 = sbr.rel (0) target = $region29
    $region28: #{tpu_custom_call.1} parent=1 // pred_region
      %76 = vsyncadd [#allocation9], 0
      %s77 = sshll.u32 %s6, 4
      %s78 = int_to_ptr.hbm [resolvable:$true] %s77
      %s79 = sshll.u32 [#allocation10], 4
      %s80 = int_to_ptr.vmem [resolvable:$true] %s79
      %85 = dma.hbm_to_vmem [thread:$0]  %s78, 1024, %s80, [#allocation9], 64, 64, 4
    $region29: #{tpu_custom_call.1} parent=1 // pred_fallthru
      _
    // Predicated region
    $region30: #{tpu_custom_call.1} parent=1 // pred_check
      _
    $region31: #{tpu_custom_call.1} parent=1 // pred_check_branch
      %87 = sbr.rel (0) target = $region33
    $region32: #{tpu_custom_call.1} parent=1 // pred_region
      _
    $region33: #{tpu_custom_call.1} parent=1 // pred_fallthru
      _
    // Predicated region
    $region34: #{tpu_custom_call.1} parent=1 // pred_check
      _
    $region35: #{tpu_custom_call.1} parent=1 // pred_check_branch
      %89 = sbr.rel (0) target = $region37
    $region36: #{tpu_custom_call.1} parent=1 // pred_region
      %91 = dma.done [#allocation3], 8192
    $region37: #{tpu_custom_call.1} parent=1 // pred_fallthru
      _
    // Predicated region
    $region38: #{tpu_custom_call.1} parent=1 // pred_check
      _
    $region39: #{tpu_custom_call.1} parent=1 // pred_check_branch
      %93 = sbr.rel (0) target = $region41
    $region40: #{tpu_custom_call.1} parent=1 // pred_region
      %95 = dma.done [#allocation6], 8192
    $region41: #{tpu_custom_call.1} parent=1 // pred_fallthru
      _
    // Predicated region
    $region42: #{tpu_custom_call.1} parent=1 // pred_check
      _
    $region43: #{tpu_custom_call.1} parent=1 // pred_check_branch
      %97 = sbr.rel (0) target = $region45
    $region44: #{tpu_custom_call.1} parent=1 // pred_region
      %99 = dma.done [#allocation6], 4096
    $region45: #{tpu_custom_call.1} parent=1 // pred_fallthru
      _
    // Predicated region
    $region46: #{tpu_custom_call.1} parent=1 // pred_check
      _
    $region47: #{tpu_custom_call.1} parent=1 // pred_check_branch
      %101 = sbr.rel (0) target = $region49
    $region48: #{tpu_custom_call.1} parent=1 // pred_region
      %103 = dma.done [#allocation9], 1024
    $region49: #{tpu_custom_call.1} parent=1 // pred_fallthru
      _
    // Predicated region
    $region50: #{tpu_custom_call.1} parent=1 // pred_check
      _
    $region51: #{tpu_custom_call.1} parent=1 // pred_check_branch
      %105 = sbr.rel (0) target = $region53
    $region52: #{tpu_custom_call.1} parent=1 // pred_region
      %107 = dma.done [#allocation9], 1024
    $region53: #{tpu_custom_call.1} parent=1 // pred_fallthru
      _
    %v108 = vld [vmem:[#allocation2] sm:$0xff]
    %v109 = vld [vmem:[#allocation2 + $0x8] sm:$0xff]
    %v110 = vld [vmem:[#allocation2 + $0x10] sm:$0xff]
    %v111 = vld [vmem:[#allocation2 + $0x18] sm:$0xff]
    %v112 = vld [vmem:[#allocation2 + $0x20] sm:$0xff]
    %v113 = vld [vmem:[#allocation2 + $0x28] sm:$0xff]
    %v114 = vld [vmem:[#allocation2 + $0x30] sm:$0xff]
    %v115 = vld [vmem:[#allocation2 + $0x38] sm:$0xff]
    %v116 = vld [vmem:[#allocation2 + $0x40] sm:$0xff]
    %v117 = vld [vmem:[#allocation2 + $0x48] sm:$0xff]
    %v118 = vld [vmem:[#allocation2 + $0x50] sm:$0xff]
    %v119 = vld [vmem:[#allocation2 + $0x58] sm:$0xff]
    %v120 = vld [vmem:[#allocation2 + $0x60] sm:$0xff]
    %v121 = vld [vmem:[#allocation2 + $0x68] sm:$0xff]
    %v122 = vld [vmem:[#allocation2 + $0x70] sm:$0xff]
    %v123 = vld [vmem:[#allocation2 + $0x78] sm:$0xff]
    %v124 = vld [vmem:[#allocation2 + $0x80] sm:$0xff]
    %v125 = vld [vmem:[#allocation2 + $0x88] sm:$0xff]
    %v126 = vld [vmem:[#allocation2 + $0x90] sm:$0xff]
    %v127 = vld [vmem:[#allocation2 + $0x98] sm:$0xff]
    %v128 = vld [vmem:[#allocation2 + $0xa0] sm:$0xff]
    %v129 = vld [vmem:[#allocation2 + $0xa8] sm:$0xff]
    %v130 = vld [vmem:[#allocation2 + $0xb0] sm:$0xff]
    %v131 = vld [vmem:[#allocation2 + $0xb8] sm:$0xff]
    %v132 = vld [vmem:[#allocation2 + $0xc0] sm:$0xff]
    %v133 = vld [vmem:[#allocation2 + $0xc8] sm:$0xff]
    %v134 = vld [vmem:[#allocation2 + $0xd0] sm:$0xff]
    %v135 = vld [vmem:[#allocation2 + $0xd8] sm:$0xff]
    %v136 = vld [vmem:[#allocation2 + $0xe0] sm:$0xff]
    %v137 = vld [vmem:[#allocation2 + $0xe8] sm:$0xff]
    %v138 = vld [vmem:[#allocation2 + $0xf0] sm:$0xff]
    %v139 = vld [vmem:[#allocation2 + $0xf8] sm:$0xff]
    %v140 = vld [vmem:[#allocation2 + $0x100] sm:$0xff]
    %v141 = vld [vmem:[#allocation2 + $0x108] sm:$0xff]
    %v142 = vld [vmem:[#allocation2 + $0x110] sm:$0xff]
    %v143 = vld [vmem:[#allocation2 + $0x118] sm:$0xff]
    %v144 = vld [vmem:[#allocation2 + $0x120] sm:$0xff]
    %v145 = vld [vmem:[#allocation2 + $0x128] sm:$0xff]
    %v146 = vld [vmem:[#allocation2 + $0x130] sm:$0xff]
    %v147 = vld [vmem:[#allocation2 + $0x138] sm:$0xff]
    %v148 = vld [vmem:[#allocation2 + $0x140] sm:$0xff]
    %v149 = vld [vmem:[#allocation2 + $0x148] sm:$0xff]
    %v150 = vld [vmem:[#allocation2 + $0x150] sm:$0xff]
    %v151 = vld [vmem:[#allocation2 + $0x158] sm:$0xff]
    %v152 = vld [vmem:[#allocation2 + $0x160] sm:$0xff]
    %v153 = vld [vmem:[#allocation2 + $0x168] sm:$0xff]
    %v154 = vld [vmem:[#allocation2 + $0x170] sm:$0xff]
    %v155 = vld [vmem:[#allocation2 + $0x178] sm:$0xff]
    %v156 = vld [vmem:[#allocation2 + $0x180] sm:$0xff]
    %v157 = vld [vmem:[#allocation2 + $0x188] sm:$0xff]
    %v158 = vld [vmem:[#allocation2 + $0x190] sm:$0xff]
    %v159 = vld [vmem:[#allocation2 + $0x198] sm:$0xff]
    %v160 = vld [vmem:[#allocation2 + $0x1a0] sm:$0xff]
    %v161 = vld [vmem:[#allocation2 + $0x1a8] sm:$0xff]
    %v162 = vld [vmem:[#allocation2 + $0x1b0] sm:$0xff]
    %v163 = vld [vmem:[#allocation2 + $0x1b8] sm:$0xff]
    %v164 = vld [vmem:[#allocation2 + $0x1c0] sm:$0xff]
    %v165 = vld [vmem:[#allocation2 + $0x1c8] sm:$0xff]
    %v166 = vld [vmem:[#allocation2 + $0x1d0] sm:$0xff]
    %v167 = vld [vmem:[#allocation2 + $0x1d8] sm:$0xff]
    %v168 = vld [vmem:[#allocation2 + $0x1e0] sm:$0xff]
    %v169 = vld [vmem:[#allocation2 + $0x1e8] sm:$0xff]
    %v170 = vld [vmem:[#allocation2 + $0x1f0] sm:$0xff]
    %v171 = vld [vmem:[#allocation2 + $0x1f8] sm:$0xff]
    %v172 = vpack.c.bf16 %v110, %v108
    %v173 = vpack.c.bf16 %v111, %v109
    %v174 = vpack.c.bf16 %v114, %v112
    %v175 = vpack.c.bf16 %v115, %v113
    %v176 = vpack.c.bf16 %v118, %v116
    %v177 = vpack.c.bf16 %v119, %v117
    %v178 = vpack.c.bf16 %v122, %v120
    %v179 = vpack.c.bf16 %v123, %v121
    %v180 = vpack.c.bf16 %v126, %v124
    %v181 = vpack.c.bf16 %v127, %v125
    %v182 = vpack.c.bf16 %v130, %v128
    %v183 = vpack.c.bf16 %v131, %v129
    %v184 = vpack.c.bf16 %v134, %v132
    %v185 = vpack.c.bf16 %v135, %v133
    %v186 = vpack.c.bf16 %v138, %v136
    %v187 = vpack.c.bf16 %v139, %v137
    %v188 = vpack.c.bf16 %v142, %v140
    %v189 = vpack.c.bf16 %v143, %v141
    %v190 = vpack.c.bf16 %v146, %v144
    %v191 = vpack.c.bf16 %v147, %v145
    %v192 = vpack.c.bf16 %v150, %v148
    %v193 = vpack.c.bf16 %v151, %v149
    %v194 = vpack.c.bf16 %v154, %v152
    %v195 = vpack.c.bf16 %v155, %v153
    %v196 = vpack.c.bf16 %v158, %v156
    %v197 = vpack.c.bf16 %v159, %v157
    %v198 = vpack.c.bf16 %v162, %v160
    %v199 = vpack.c.bf16 %v163, %v161
    %v200 = vpack.c.bf16 %v166, %v164
    %v201 = vpack.c.bf16 %v167, %v165
    %v202 = vpack.c.bf16 %v170, %v168
    %v203 = vpack.c.bf16 %v171, %v169
    %v204 = vld [vmem:[#allocation5] sm:$0xff]
    %v205 = vld [vmem:[#allocation5 + $0x8] sm:$0xff]
    %v206 = vld [vmem:[#allocation5 + $0x10] sm:$0xff]
    %v207 = vld [vmem:[#allocation5 + $0x18] sm:$0xff]
    %v208 = vld [vmem:[#allocation5 + $0x20] sm:$0xff]
    %v209 = vld [vmem:[#allocation5 + $0x28] sm:$0xff]
    %v210 = vld [vmem:[#allocation5 + $0x30] sm:$0xff]
    %v211 = vld [vmem:[#allocation5 + $0x38] sm:$0xff]
    %v212 = vld [vmem:[#allocation5 + $0x40] sm:$0xff]
    %v213 = vld [vmem:[#allocation5 + $0x48] sm:$0xff]
    %v214 = vld [vmem:[#allocation5 + $0x50] sm:$0xff]
    %v215 = vld [vmem:[#allocation5 + $0x58] sm:$0xff]
    %v216 = vld [vmem:[#allocation5 + $0x60] sm:$0xff]
    %v217 = vld [vmem:[#allocation5 + $0x68] sm:$0xff]
    %v218 = vld [vmem:[#allocation5 + $0x70] sm:$0xff]
    %v219 = vld [vmem:[#allocation5 + $0x78] sm:$0xff]
    %v220 = vld [vmem:[#allocation5 + $0x80] sm:$0xff]
    %v221 = vld [vmem:[#allocation5 + $0x88] sm:$0xff]
    %v222 = vld [vmem:[#allocation5 + $0x90] sm:$0xff]
    %v223 = vld [vmem:[#allocation5 + $0x98] sm:$0xff]
    %v224 = vld [vmem:[#allocation5 + $0xa0] sm:$0xff]
    %v225 = vld [vmem:[#allocation5 + $0xa8] sm:$0xff]
    %v226 = vld [vmem:[#allocation5 + $0xb0] sm:$0xff]
    %v227 = vld [vmem:[#allocation5 + $0xb8] sm:$0xff]
    %v228 = vld [vmem:[#allocation5 + $0xc0] sm:$0xff]
    %v229 = vld [vmem:[#allocation5 + $0xc8] sm:$0xff]
    %v230 = vld [vmem:[#allocation5 + $0xd0] sm:$0xff]
    %v231 = vld [vmem:[#allocation5 + $0xd8] sm:$0xff]
    %v232 = vld [vmem:[#allocation5 + $0xe0] sm:$0xff]
    %v233 = vld [vmem:[#allocation5 + $0xe8] sm:$0xff]
    %v234 = vld [vmem:[#allocation5 + $0xf0] sm:$0xff]
    %v235 = vld [vmem:[#allocation5 + $0xf8] sm:$0xff]
    %v236 = vld [vmem:[#allocation5 + $0x100] sm:$0xff]
    %v237 = vld [vmem:[#allocation5 + $0x108] sm:$0xff]
    %v238 = vld [vmem:[#allocation5 + $0x110] sm:$0xff]
    %v239 = vld [vmem:[#allocation5 + $0x118] sm:$0xff]
    %v240 = vld [vmem:[#allocation5 + $0x120] sm:$0xff]
    %v241 = vld [vmem:[#allocation5 + $0x128] sm:$0xff]
    %v242 = vld [vmem:[#allocation5 + $0x130] sm:$0xff]
    %v243 = vld [vmem:[#allocation5 + $0x138] sm:$0xff]
    %v244 = vld [vmem:[#allocation5 + $0x140] sm:$0xff]
    %v245 = vld [vmem:[#allocation5 + $0x148] sm:$0xff]
    %v246 = vld [vmem:[#allocation5 + $0x150] sm:$0xff]
    %v247 = vld [vmem:[#allocation5 + $0x158] sm:$0xff]
    %v248 = vld [vmem:[#allocation5 + $0x160] sm:$0xff]
    %v249 = vld [vmem:[#allocation5 + $0x168] sm:$0xff]
    %v250 = vld [vmem:[#allocation5 + $0x170] sm:$0xff]
    %v251 = vld [vmem:[#allocation5 + $0x178] sm:$0xff]
    %v252 = vld [vmem:[#allocation5 + $0x180] sm:$0xff]
    %v253 = vld [vmem:[#allocation5 + $0x188] sm:$0xff]
    %v254 = vld [vmem:[#allocation5 + $0x190] sm:$0xff]
    %v255 = vld [vmem:[#allocation5 + $0x198] sm:$0xff]
    %v256 = vld [vmem:[#allocation5 + $0x1a0] sm:$0xff]
    %v257 = vld [vmem:[#allocation5 + $0x1a8] sm:$0xff]
    %v258 = vld [vmem:[#allocation5 + $0x1b0] sm:$0xff]
    %v259 = vld [vmem:[#allocation5 + $0x1b8] sm:$0xff]
    %v260 = vld [vmem:[#allocation5 + $0x1c0] sm:$0xff]
    %v261 = vld [vmem:[#allocation5 + $0x1c8] sm:$0xff]
    %v262 = vld [vmem:[#allocation5 + $0x1d0] sm:$0xff]
    %v263 = vld [vmem:[#allocation5 + $0x1d8] sm:$0xff]
    %v264 = vld [vmem:[#allocation5 + $0x1e0] sm:$0xff]
    %v265 = vld [vmem:[#allocation5 + $0x1e8] sm:$0xff]
    %v266 = vld [vmem:[#allocation5 + $0x1f0] sm:$0xff]
    %v267 = vld [vmem:[#allocation5 + $0x1f8] sm:$0xff]
    %v268 = vpack.c.bf16 %v206, %v204
    %v269 = vpack.c.bf16 %v207, %v205
    %v270 = vpack.c.bf16 %v210, %v208
    %v271 = vpack.c.bf16 %v211, %v209
    %v272 = vpack.c.bf16 %v214, %v212
    %v273 = vpack.c.bf16 %v215, %v213
    %v274 = vpack.c.bf16 %v218, %v216
    %v275 = vpack.c.bf16 %v219, %v217
    %v276 = vpack.c.bf16 %v222, %v220
    %v277 = vpack.c.bf16 %v223, %v221
    %v278 = vpack.c.bf16 %v226, %v224
    %v279 = vpack.c.bf16 %v227, %v225
    %v280 = vpack.c.bf16 %v230, %v228
    %v281 = vpack.c.bf16 %v231, %v229
    %v282 = vpack.c.bf16 %v234, %v232
    %v283 = vpack.c.bf16 %v235, %v233
    %v284 = vpack.c.bf16 %v238, %v236
    %v285 = vpack.c.bf16 %v239, %v237
    %v286 = vpack.c.bf16 %v242, %v240
    %v287 = vpack.c.bf16 %v243, %v241
    %v288 = vpack.c.bf16 %v246, %v244
    %v289 = vpack.c.bf16 %v247, %v245
    %v290 = vpack.c.bf16 %v250, %v248
    %v291 = vpack.c.bf16 %v251, %v249
    %v292 = vpack.c.bf16 %v254, %v252
    %v293 = vpack.c.bf16 %v255, %v253
    %v294 = vpack.c.bf16 %v258, %v256
    %v295 = vpack.c.bf16 %v259, %v257
    %v296 = vpack.c.bf16 %v262, %v260
    %v297 = vpack.c.bf16 %v263, %v261
    %v298 = vpack.c.bf16 %v266, %v264
    %v299 = vpack.c.bf16 %v267, %v265
    %300 = vmatpush.bf16.msra.mxu0 %v282
    %301 = vmatpush.bf16.msra.mxu0 %v280
    %302 = vmatpush.bf16.msra.mxu0 %v278
    %303 = vmatpush.bf16.msra.mxu0 %v276
    %304 = vmatpush.bf16.msra.mxu0 %v274
    %305 = vmatpush.bf16.msra.mxu0 %v272
    %306 = vmatpush.bf16.msra.mxu0 %v270
    %307 = vmatpush.bf16.msra.mxu0 %v268
    %308 = vmatmul.bf16.gmra.mxu0 %v172
    %v309 = vpop.f32.mrf.mxu0
    %v310 = vadd.f32 0.0, %v309
    %v311 = vpop.f32.mrf.mxu0
    %v312 = vadd.f32 0.0, %v311
    %313 = vmatmul.bf16.gmra.mxu0 %v174
    %v314 = vpop.f32.mrf.mxu0
    %v315 = vadd.f32 0.0, %v314
    %v316 = vpop.f32.mrf.mxu0
    %v317 = vadd.f32 0.0, %v316
    %318 = vmatmul.bf16.gmra.mxu0 %v176
    %v319 = vpop.f32.mrf.mxu0
    %v320 = vadd.f32 0.0, %v319
    %v321 = vpop.f32.mrf.mxu0
    %v322 = vadd.f32 0.0, %v321
    %323 = vmatmul.bf16.gmra.mxu0 %v178
    %v324 = vpop.f32.mrf.mxu0
    %v325 = vadd.f32 0.0, %v324
    %v326 = vpop.f32.mrf.mxu0
    %v327 = vadd.f32 0.0, %v326
    %328 = vmatmul.bf16.gmra.mxu0 %v180
    %v329 = vpop.f32.mrf.mxu0
    %v330 = vadd.f32 0.0, %v329
    %v331 = vpop.f32.mrf.mxu0
    %v332 = vadd.f32 0.0, %v331
    %333 = vmatmul.bf16.gmra.mxu0 %v182
    %v334 = vpop.f32.mrf.mxu0
    %v335 = vadd.f32 0.0, %v334
    %v336 = vpop.f32.mrf.mxu0
    %v337 = vadd.f32 0.0, %v336
    %338 = vmatmul.bf16.gmra.mxu0 %v184
    %v339 = vpop.f32.mrf.mxu0
    %v340 = vadd.f32 0.0, %v339
    %v341 = vpop.f32.mrf.mxu0
    %v342 = vadd.f32 0.0, %v341
    %343 = vmatmul.bf16.gmra.mxu0 %v186
    %v344 = vpop.f32.mrf.mxu0
    %v345 = vadd.f32 0.0, %v344
    %v346 = vpop.f32.mrf.mxu0
    %v347 = vadd.f32 0.0, %v346
    %348 = vmatmul.bf16.gmra.mxu0 %v188
    %v349 = vpop.f32.mrf.mxu0
    %v350 = vadd.f32 0.0, %v349
    %v351 = vpop.f32.mrf.mxu0
    %v352 = vadd.f32 0.0, %v351
    %353 = vmatmul.bf16.gmra.mxu0 %v190
    %v354 = vpop.f32.mrf.mxu0
    %v355 = vadd.f32 0.0, %v354
    %v356 = vpop.f32.mrf.mxu0
    %v357 = vadd.f32 0.0, %v356
    %358 = vmatmul.bf16.gmra.mxu0 %v192
    %v359 = vpop.f32.mrf.mxu0
    %v360 = vadd.f32 0.0, %v359
    %v361 = vpop.f32.mrf.mxu0
    %v362 = vadd.f32 0.0, %v361
    %363 = vmatmul.bf16.gmra.mxu0 %v194
    %v364 = vpop.f32.mrf.mxu0
    %v365 = vadd.f32 0.0, %v364
    %v366 = vpop.f32.mrf.mxu0
    %v367 = vadd.f32 0.0, %v366
    %368 = vmatmul.bf16.gmra.mxu0 %v196
    %v369 = vpop.f32.mrf.mxu0
    %v370 = vadd.f32 0.0, %v369
    %v371 = vpop.f32.mrf.mxu0
    %v372 = vadd.f32 0.0, %v371
    %373 = vmatmul.bf16.gmra.mxu0 %v198
    %v374 = vpop.f32.mrf.mxu0
    %v375 = vadd.f32 0.0, %v374
    %v376 = vpop.f32.mrf.mxu0
    %v377 = vadd.f32 0.0, %v376
    %378 = vmatmul.bf16.gmra.mxu0 %v200
    %v379 = vpop.f32.mrf.mxu0
    %v380 = vadd.f32 0.0, %v379
    %v381 = vpop.f32.mrf.mxu0
    %v382 = vadd.f32 0.0, %v381
    %383 = vmatmul.bf16.gmra.mxu0 %v202
    %v384 = vpop.f32.mrf.mxu0
    %v385 = vadd.f32 0.0, %v384
    %v386 = vpop.f32.mrf.mxu0
    %v387 = vadd.f32 0.0, %v386
    %388 = vdwg.mxu0
    %389 = vmatpush.bf16.msra.mxu0 %v298
    %390 = vmatpush.bf16.msra.mxu0 %v296
    %391 = vmatpush.bf16.msra.mxu0 %v294
    %392 = vmatpush.bf16.msra.mxu0 %v292
    %393 = vmatpush.bf16.msra.mxu0 %v290
    %394 = vmatpush.bf16.msra.mxu0 %v288
    %395 = vmatpush.bf16.msra.mxu0 %v286
    %396 = vmatpush.bf16.msra.mxu0 %v284
    %397 = vmatmul.bf16.gmra.mxu0 %v173
    %v398 = vpop.f32.mrf.mxu0
    %v399 = vadd.f32 %v310, %v398
    %v400 = vpop.f32.mrf.mxu0
    %v401 = vadd.f32 %v312, %v400
    %402 = vmatmul.bf16.gmra.mxu0 %v175
    %v403 = vpop.f32.mrf.mxu0
    %v404 = vadd.f32 %v315, %v403
    %v405 = vpop.f32.mrf.mxu0
    %v406 = vadd.f32 %v317, %v405
    %407 = vmatmul.bf16.gmra.mxu0 %v177
    %v408 = vpop.f32.mrf.mxu0
    %v409 = vadd.f32 %v320, %v408
    %v410 = vpop.f32.mrf.mxu0
    %v411 = vadd.f32 %v322, %v410
    %412 = vmatmul.bf16.gmra.mxu0 %v179
    %v413 = vpop.f32.mrf.mxu0
    %v414 = vadd.f32 %v325, %v413
    %v415 = vpop.f32.mrf.mxu0
    %v416 = vadd.f32 %v327, %v415
    %417 = vmatmul.bf16.gmra.mxu0 %v181
    %v418 = vpop.f32.mrf.mxu0
    %v419 = vadd.f32 %v330, %v418
    %v420 = vpop.f32.mrf.mxu0
    %v421 = vadd.f32 %v332, %v420
    %422 = vmatmul.bf16.gmra.mxu0 %v183
    %v423 = vpop.f32.mrf.mxu0
    %v424 = vadd.f32 %v335, %v423
    %v425 = vpop.f32.mrf.mxu0
    %v426 = vadd.f32 %v337, %v425
    %427 = vmatmul.bf16.gmra.mxu0 %v185
    %v428 = vpop.f32.mrf.mxu0
    %v429 = vadd.f32 %v340, %v428
    %v430 = vpop.f32.mrf.mxu0
    %v431 = vadd.f32 %v342, %v430
    %432 = vmatmul.bf16.gmra.mxu0 %v187
    %v433 = vpop.f32.mrf.mxu0
    %v434 = vadd.f32 %v345, %v433
    %v435 = vpop.f32.mrf.mxu0
    %v436 = vadd.f32 %v347, %v435
    %437 = vmatmul.bf16.gmra.mxu0 %v189
    %v438 = vpop.f32.mrf.mxu0
    %v439 = vadd.f32 %v350, %v438
    %v440 = vpop.f32.mrf.mxu0
    %v441 = vadd.f32 %v352, %v440
    %442 = vmatmul.bf16.gmra.mxu0 %v191
    %v443 = vpop.f32.mrf.mxu0
    %v444 = vadd.f32 %v355, %v443
    %v445 = vpop.f32.mrf.mxu0
    %v446 = vadd.f32 %v357, %v445
    %447 = vmatmul.bf16.gmra.mxu0 %v193
    %v448 = vpop.f32.mrf.mxu0
    %v449 = vadd.f32 %v360, %v448
    %v450 = vpop.f32.mrf.mxu0
    %v451 = vadd.f32 %v362, %v450
    %452 = vmatmul.bf16.gmra.mxu0 %v195
    %v453 = vpop.f32.mrf.mxu0
    %v454 = vadd.f32 %v365, %v453
    %v455 = vpop.f32.mrf.mxu0
    %v456 = vadd.f32 %v367, %v455
    %457 = vmatmul.bf16.gmra.mxu0 %v197
    %v458 = vpop.f32.mrf.mxu0
    %v459 = vadd.f32 %v370, %v458
    %v460 = vpop.f32.mrf.mxu0
    %v461 = vadd.f32 %v372, %v460
    %462 = vmatmul.bf16.gmra.mxu0 %v199
    %v463 = vpop.f32.mrf.mxu0
    %v464 = vadd.f32 %v375, %v463
    %v465 = vpop.f32.mrf.mxu0
    %v466 = vadd.f32 %v377, %v465
    %467 = vmatmul.bf16.gmra.mxu0 %v201
    %v468 = vpop.f32.mrf.mxu0
    %v469 = vadd.f32 %v380, %v468
    %v470 = vpop.f32.mrf.mxu0
    %v471 = vadd.f32 %v382, %v470
    %472 = vmatmul.bf16.gmra.mxu0 %v203
    %v473 = vpop.f32.mrf.mxu0
    %v474 = vadd.f32 %v385, %v473
    %v475 = vpop.f32.mrf.mxu0
    %v476 = vadd.f32 %v387, %v475
    %477 = vdwg.mxu0
    %478 = vmatpush.bf16.msra.mxu0 %v283
    %479 = vmatpush.bf16.msra.mxu0 %v281
    %480 = vmatpush.bf16.msra.mxu0 %v279
    %481 = vmatpush.bf16.msra.mxu0 %v277
    %482 = vmatpush.bf16.msra.mxu0 %v275
    %483 = vmatpush.bf16.msra.mxu0 %v273
    %484 = vmatpush.bf16.msra.mxu0 %v271
    %485 = vmatpush.bf16.msra.mxu0 %v269
    %486 = vmatmul.bf16.gmra.mxu0 %v172
    %v487 = vpop.f32.mrf.mxu0
    %v488 = vadd.f32 0.0, %v487
    %v489 = vpop.f32.mrf.mxu0
    %v490 = vadd.f32 0.0, %v489
    %491 = vmatmul.bf16.gmra.mxu0 %v174
    %v492 = vpop.f32.mrf.mxu0
    %v493 = vadd.f32 0.0, %v492
    %v494 = vpop.f32.mrf.mxu0
    %v495 = vadd.f32 0.0, %v494
    %496 = vmatmul.bf16.gmra.mxu0 %v176
    %v497 = vpop.f32.mrf.mxu0
    %v498 = vadd.f32 0.0, %v497
    %v499 = vpop.f32.mrf.mxu0
    %v500 = vadd.f32 0.0, %v499
    %501 = vmatmul.bf16.gmra.mxu0 %v178
    %v502 = vpop.f32.mrf.mxu0
    %v503 = vadd.f32 0.0, %v502
    %v504 = vpop.f32.mrf.mxu0
    %v505 = vadd.f32 0.0, %v504
    %506 = vmatmul.bf16.gmra.mxu0 %v180
    %v507 = vpop.f32.mrf.mxu0
    %v508 = vadd.f32 0.0, %v507
    %v509 = vpop.f32.mrf.mxu0
    %v510 = vadd.f32 0.0, %v509
    %511 = vmatmul.bf16.gmra.mxu0 %v182
    %v512 = vpop.f32.mrf.mxu0
    %v513 = vadd.f32 0.0, %v512
    %v514 = vpop.f32.mrf.mxu0
    %v515 = vadd.f32 0.0, %v514
    %516 = vmatmul.bf16.gmra.mxu0 %v184
    %v517 = vpop.f32.mrf.mxu0
    %v518 = vadd.f32 0.0, %v517
    %v519 = vpop.f32.mrf.mxu0
    %v520 = vadd.f32 0.0, %v519
    %521 = vmatmul.bf16.gmra.mxu0 %v186
    %v522 = vpop.f32.mrf.mxu0
    %v523 = vadd.f32 0.0, %v522
    %v524 = vpop.f32.mrf.mxu0
    %v525 = vadd.f32 0.0, %v524
    %526 = vmatmul.bf16.gmra.mxu0 %v188
    %v527 = vpop.f32.mrf.mxu0
    %v528 = vadd.f32 0.0, %v527
    %v529 = vpop.f32.mrf.mxu0
    %v530 = vadd.f32 0.0, %v529
    %531 = vmatmul.bf16.gmra.mxu0 %v190
    %v532 = vpop.f32.mrf.mxu0
    %v533 = vadd.f32 0.0, %v532
    %v534 = vpop.f32.mrf.mxu0
    %v535 = vadd.f32 0.0, %v534
    %536 = vmatmul.bf16.gmra.mxu0 %v192
    %v537 = vpop.f32.mrf.mxu0
    %v538 = vadd.f32 0.0, %v537
    %v539 = vpop.f32.mrf.mxu0
    %v540 = vadd.f32 0.0, %v539
    %541 = vmatmul.bf16.gmra.mxu0 %v194
    %v542 = vpop.f32.mrf.mxu0
    %v543 = vadd.f32 0.0, %v542
    %v544 = vpop.f32.mrf.mxu0
    %v545 = vadd.f32 0.0, %v544
    %546 = vmatmul.bf16.gmra.mxu0 %v196
    %v547 = vpop.f32.mrf.mxu0
    %v548 = vadd.f32 0.0, %v547
    %v549 = vpop.f32.mrf.mxu0
    %v550 = vadd.f32 0.0, %v549
    %551 = vmatmul.bf16.gmra.mxu0 %v198
    %v552 = vpop.f32.mrf.mxu0
    %v553 = vadd.f32 0.0, %v552
    %v554 = vpop.f32.mrf.mxu0
    %v555 = vadd.f32 0.0, %v554
    %556 = vmatmul.bf16.gmra.mxu0 %v200
    %v557 = vpop.f32.mrf.mxu0
    %v558 = vadd.f32 0.0, %v557
    %v559 = vpop.f32.mrf.mxu0
    %v560 = vadd.f32 0.0, %v559
    %561 = vmatmul.bf16.gmra.mxu0 %v202
    %v562 = vpop.f32.mrf.mxu0
    %v563 = vadd.f32 0.0, %v562
    %v564 = vpop.f32.mrf.mxu0
    %v565 = vadd.f32 0.0, %v564
    %566 = vdwg.mxu0
    %567 = vmatpush.bf16.msra.mxu0 %v299
    %568 = vmatpush.bf16.msra.mxu0 %v297
    %569 = vmatpush.bf16.msra.mxu0 %v295
    %570 = vmatpush.bf16.msra.mxu0 %v293
    %571 = vmatpush.bf16.msra.mxu0 %v291
    %572 = vmatpush.bf16.msra.mxu0 %v289
    %573 = vmatpush.bf16.msra.mxu0 %v287
    %574 = vmatpush.bf16.msra.mxu0 %v285
    %575 = vmatmul.bf16.gmra.mxu0 %v173
    %v576 = vpop.f32.mrf.mxu0
    %v577 = vadd.f32 %v488, %v576
    %v578 = vpop.f32.mrf.mxu0
    %v579 = vadd.f32 %v490, %v578
    %580 = vmatmul.bf16.gmra.mxu0 %v175
    %v581 = vpop.f32.mrf.mxu0
    %v582 = vadd.f32 %v493, %v581
    %v583 = vpop.f32.mrf.mxu0
    %v584 = vadd.f32 %v495, %v583
    %585 = vmatmul.bf16.gmra.mxu0 %v177
    %v586 = vpop.f32.mrf.mxu0
    %v587 = vadd.f32 %v498, %v586
    %v588 = vpop.f32.mrf.mxu0
    %v589 = vadd.f32 %v500, %v588
    %590 = vmatmul.bf16.gmra.mxu0 %v179
    %v591 = vpop.f32.mrf.mxu0
    %v592 = vadd.f32 %v503, %v591
    %v593 = vpop.f32.mrf.mxu0
    %v594 = vadd.f32 %v505, %v593
    %595 = vmatmul.bf16.gmra.mxu0 %v181
    %v596 = vpop.f32.mrf.mxu0
    %v597 = vadd.f32 %v508, %v596
    %v598 = vpop.f32.mrf.mxu0
    %v599 = vadd.f32 %v510, %v598
    %600 = vmatmul.bf16.gmra.mxu0 %v183
    %v601 = vpop.f32.mrf.mxu0
    %v602 = vadd.f32 %v513, %v601
    %v603 = vpop.f32.mrf.mxu0
    %v604 = vadd.f32 %v515, %v603
    %605 = vmatmul.bf16.gmra.mxu0 %v185
    %v606 = vpop.f32.mrf.mxu0
    %v607 = vadd.f32 %v518, %v606
    %v608 = vpop.f32.mrf.mxu0
    %v609 = vadd.f32 %v520, %v608
    %610 = vmatmul.bf16.gmra.mxu0 %v187
    %v611 = vpop.f32.mrf.mxu0
    %v612 = vadd.f32 %v523, %v611
    %v613 = vpop.f32.mrf.mxu0
    %v614 = vadd.f32 %v525, %v613
    %615 = vmatmul.bf16.gmra.mxu0 %v189
    %v616 = vpop.f32.mrf.mxu0
    %v617 = vadd.f32 %v528, %v616
    %v618 = vpop.f32.mrf.mxu0
    %v619 = vadd.f32 %v530, %v618
    %620 = vmatmul.bf16.gmra.mxu0 %v191
    %v621 = vpop.f32.mrf.mxu0
    %v622 = vadd.f32 %v533, %v621
    %v623 = vpop.f32.mrf.mxu0
    %v624 = vadd.f32 %v535, %v623
    %625 = vmatmul.bf16.gmra.mxu0 %v193
    %v626 = vpop.f32.mrf.mxu0
    %v627 = vadd.f32 %v538, %v626
    %v628 = vpop.f32.mrf.mxu0
    %v629 = vadd.f32 %v540, %v628
    %630 = vmatmul.bf16.gmra.mxu0 %v195
    %v631 = vpop.f32.mrf.mxu0
    %v632 = vadd.f32 %v543, %v631
    %v633 = vpop.f32.mrf.mxu0
    %v634 = vadd.f32 %v545, %v633
    %635 = vmatmul.bf16.gmra.mxu0 %v197
    %v636 = vpop.f32.mrf.mxu0
    %v637 = vadd.f32 %v548, %v636
    %v638 = vpop.f32.mrf.mxu0
    %v639 = vadd.f32 %v550, %v638
    %640 = vmatmul.bf16.gmra.mxu0 %v199
    %v641 = vpop.f32.mrf.mxu0
    %v642 = vadd.f32 %v553, %v641
    %v643 = vpop.f32.mrf.mxu0
    %v644 = vadd.f32 %v555, %v643
    %645 = vmatmul.bf16.gmra.mxu0 %v201
    %v646 = vpop.f32.mrf.mxu0
    %v647 = vadd.f32 %v558, %v646
    %v648 = vpop.f32.mrf.mxu0
    %v649 = vadd.f32 %v560, %v648
    %650 = vmatmul.bf16.gmra.mxu0 %v203
    %v651 = vpop.f32.mrf.mxu0
    %v652 = vadd.f32 %v563, %v651
    %v653 = vpop.f32.mrf.mxu0
    %v654 = vadd.f32 %v565, %v653
    %655 = vdwg.mxu0
    %v656 = vpack.c.bf16 %v401, %v399
    %v657 = vpack.c.bf16 %v579, %v577
    %v658 = vpack.c.bf16 %v406, %v404
    %v659 = vpack.c.bf16 %v584, %v582
    %v660 = vpack.c.bf16 %v411, %v409
    %v661 = vpack.c.bf16 %v589, %v587
    %v662 = vpack.c.bf16 %v416, %v414
    %v663 = vpack.c.bf16 %v594, %v592
    %v664 = vpack.c.bf16 %v421, %v419
    %v665 = vpack.c.bf16 %v599, %v597
    %v666 = vpack.c.bf16 %v426, %v424
    %v667 = vpack.c.bf16 %v604, %v602
    %v668 = vpack.c.bf16 %v431, %v429
    %v669 = vpack.c.bf16 %v609, %v607
    %v670 = vpack.c.bf16 %v436, %v434
    %v671 = vpack.c.bf16 %v614, %v612
    %v672 = vpack.c.bf16 %v441, %v439
    %v673 = vpack.c.bf16 %v619, %v617
    %v674 = vpack.c.bf16 %v446, %v444
    %v675 = vpack.c.bf16 %v624, %v622
    %v676 = vpack.c.bf16 %v451, %v449
    %v677 = vpack.c.bf16 %v629, %v627
    %v678 = vpack.c.bf16 %v456, %v454
    %v679 = vpack.c.bf16 %v634, %v632
    %v680 = vpack.c.bf16 %v461, %v459
    %v681 = vpack.c.bf16 %v639, %v637
    %v682 = vpack.c.bf16 %v466, %v464
    %v683 = vpack.c.bf16 %v644, %v642
    %v684 = vpack.c.bf16 %v471, %v469
    %v685 = vpack.c.bf16 %v649, %v647
    %v686 = vpack.c.bf16 %v476, %v474
    %v687 = vpack.c.bf16 %v654, %v652
    %v688 = vld [vmem:[#allocation7] sm:$0xff]
    %v689 = vld [vmem:[#allocation7 + $0x8] sm:$0xff]
    %v690 = vld [vmem:[#allocation7 + $0x10] sm:$0xff]
    %v691 = vld [vmem:[#allocation7 + $0x18] sm:$0xff]
    %v692 = vld [vmem:[#allocation7 + $0x20] sm:$0xff]
    %v693 = vld [vmem:[#allocation7 + $0x28] sm:$0xff]
    %v694 = vld [vmem:[#allocation7 + $0x30] sm:$0xff]
    %v695 = vld [vmem:[#allocation7 + $0x38] sm:$0xff]
    %v696 = vld [vmem:[#allocation7 + $0x40] sm:$0xff]
    %v697 = vld [vmem:[#allocation7 + $0x48] sm:$0xff]
    %v698 = vld [vmem:[#allocation7 + $0x50] sm:$0xff]
    %v699 = vld [vmem:[#allocation7 + $0x58] sm:$0xff]
    %v700 = vld [vmem:[#allocation7 + $0x60] sm:$0xff]
    %v701 = vld [vmem:[#allocation7 + $0x68] sm:$0xff]
    %v702 = vld [vmem:[#allocation7 + $0x70] sm:$0xff]
    %v703 = vld [vmem:[#allocation7 + $0x78] sm:$0xff]
    %v704 = vld [vmem:[#allocation7 + $0x80] sm:$0xff]
    %v705 = vld [vmem:[#allocation7 + $0x88] sm:$0xff]
    %v706 = vld [vmem:[#allocation7 + $0x90] sm:$0xff]
    %v707 = vld [vmem:[#allocation7 + $0x98] sm:$0xff]
    %v708 = vld [vmem:[#allocation7 + $0xa0] sm:$0xff]
    %v709 = vld [vmem:[#allocation7 + $0xa8] sm:$0xff]
    %v710 = vld [vmem:[#allocation7 + $0xb0] sm:$0xff]
    %v711 = vld [vmem:[#allocation7 + $0xb8] sm:$0xff]
    %v712 = vld [vmem:[#allocation7 + $0xc0] sm:$0xff]
    %v713 = vld [vmem:[#allocation7 + $0xc8] sm:$0xff]
    %v714 = vld [vmem:[#allocation7 + $0xd0] sm:$0xff]
    %v715 = vld [vmem:[#allocation7 + $0xd8] sm:$0xff]
    %v716 = vld [vmem:[#allocation7 + $0xe0] sm:$0xff]
    %v717 = vld [vmem:[#allocation7 + $0xe8] sm:$0xff]
    %v718 = vld [vmem:[#allocation7 + $0xf0] sm:$0xff]
    %v719 = vld [vmem:[#allocation7 + $0xf8] sm:$0xff]
    %v752 = vunpack.c.l.b16 %v688
    %v753 = vunpack.c.h.b16 %v688
    %v754 = vunpack.c.l.b16 %v689
    %v755 = vunpack.c.h.b16 %v689
    %v756 = vunpack.c.l.b16 %v690
    %v757 = vunpack.c.h.b16 %v690
    %v758 = vunpack.c.l.b16 %v691
    %v759 = vunpack.c.h.b16 %v691
    %v760 = vunpack.c.l.b16 %v692
    %v761 = vunpack.c.h.b16 %v692
    %v762 = vunpack.c.l.b16 %v693
    %v763 = vunpack.c.h.b16 %v693
    %v764 = vunpack.c.l.b16 %v694
    %v765 = vunpack.c.h.b16 %v694
    %v766 = vunpack.c.l.b16 %v695
    %v767 = vunpack.c.h.b16 %v695
    %v768 = vunpack.c.l.b16 %v696
    %v769 = vunpack.c.h.b16 %v696
    %v770 = vunpack.c.l.b16 %v697
    %v771 = vunpack.c.h.b16 %v697
    %v772 = vunpack.c.l.b16 %v698
    %v773 = vunpack.c.h.b16 %v698
    %v774 = vunpack.c.l.b16 %v699
    %v775 = vunpack.c.h.b16 %v699
    %v776 = vunpack.c.l.b16 %v700
    %v777 = vunpack.c.h.b16 %v700
    %v778 = vunpack.c.l.b16 %v701
    %v779 = vunpack.c.h.b16 %v701
    %v780 = vunpack.c.l.b16 %v702
    %v781 = vunpack.c.h.b16 %v702
    %v782 = vunpack.c.l.b16 %v703
    %v783 = vunpack.c.h.b16 %v703
    %v784 = vunpack.c.l.b16 %v704
    %v785 = vunpack.c.h.b16 %v704
    %v786 = vunpack.c.l.b16 %v705
    %v787 = vunpack.c.h.b16 %v705
    %v788 = vunpack.c.l.b16 %v706
    %v789 = vunpack.c.h.b16 %v706
    %v790 = vunpack.c.l.b16 %v707
    %v791 = vunpack.c.h.b16 %v707
    %v792 = vunpack.c.l.b16 %v708
    %v793 = vunpack.c.h.b16 %v708
    %v794 = vunpack.c.l.b16 %v709
    %v795 = vunpack.c.h.b16 %v709
    %v796 = vunpack.c.l.b16 %v710
    %v797 = vunpack.c.h.b16 %v710
    %v798 = vunpack.c.l.b16 %v711
    %v799 = vunpack.c.h.b16 %v711
    %v800 = vunpack.c.l.b16 %v712
    %v801 = vunpack.c.h.b16 %v712
    %v802 = vunpack.c.l.b16 %v713
    %v803 = vunpack.c.h.b16 %v713
    %v804 = vunpack.c.l.b16 %v714
    %v805 = vunpack.c.h.b16 %v714
    %v806 = vunpack.c.l.b16 %v715
    %v807 = vunpack.c.h.b16 %v715
    %v808 = vunpack.c.l.b16 %v716
    %v809 = vunpack.c.h.b16 %v716
    %v810 = vunpack.c.l.b16 %v717
    %v811 = vunpack.c.h.b16 %v717
    %v812 = vunpack.c.l.b16 %v718
    %v813 = vunpack.c.h.b16 %v718
    %v814 = vunpack.c.l.b16 %v719
    %v815 = vunpack.c.h.b16 %v719
    %v816 = vpack.c.b16 %v754, %v752
    %v817 = vpack.c.b16 %v755, %v753
    %v818 = vpack.c.b16 %v758, %v756
    %v819 = vpack.c.b16 %v759, %v757
    %v820 = vpack.c.b16 %v762, %v760
    %v821 = vpack.c.b16 %v763, %v761
    %v822 = vpack.c.b16 %v766, %v764
    %v823 = vpack.c.b16 %v767, %v765
    %v824 = vpack.c.b16 %v770, %v768
    %v825 = vpack.c.b16 %v771, %v769
    %v826 = vpack.c.b16 %v774, %v772
    %v827 = vpack.c.b16 %v775, %v773
    %v828 = vpack.c.b16 %v778, %v776
    %v829 = vpack.c.b16 %v779, %v777
    %v830 = vpack.c.b16 %v782, %v780
    %v831 = vpack.c.b16 %v783, %v781
    %v832 = vpack.c.b16 %v786, %v784
    %v833 = vpack.c.b16 %v787, %v785
    %v834 = vpack.c.b16 %v790, %v788
    %v835 = vpack.c.b16 %v791, %v789
    %v836 = vpack.c.b16 %v794, %v792
    %v837 = vpack.c.b16 %v795, %v793
    %v838 = vpack.c.b16 %v798, %v796
    %v839 = vpack.c.b16 %v799, %v797
    %v840 = vpack.c.b16 %v802, %v800
    %v841 = vpack.c.b16 %v803, %v801
    %v842 = vpack.c.b16 %v806, %v804
    %v843 = vpack.c.b16 %v807, %v805
    %v844 = vpack.c.b16 %v810, %v808
    %v845 = vpack.c.b16 %v811, %v809
    %v846 = vpack.c.b16 %v814, %v812
    %v847 = vpack.c.b16 %v815, %v813
    %880 = vmatpush.bf16.msra.mxu0 %v830
    %881 = vmatpush.bf16.msra.mxu0 %v828
    %882 = vmatpush.bf16.msra.mxu0 %v826
    %883 = vmatpush.bf16.msra.mxu0 %v824
    %884 = vmatpush.bf16.msra.mxu0 %v822
    %885 = vmatpush.bf16.msra.mxu0 %v820
    %886 = vmatpush.bf16.msra.mxu0 %v818
    %887 = vmatpush.bf16.msra.mxu0 %v816
    %888 = vmatmul.bf16.gmra.mxu0 %v656
    %v889 = vpop.f32.mrf.mxu0
    %v890 = vadd.f32 0.0, %v889
    %v891 = vpop.f32.mrf.mxu0
    %v892 = vadd.f32 0.0, %v891
    %893 = vmatmul.bf16.gmra.mxu0 %v658
    %v894 = vpop.f32.mrf.mxu0
    %v895 = vadd.f32 0.0, %v894
    %v896 = vpop.f32.mrf.mxu0
    %v897 = vadd.f32 0.0, %v896
    %898 = vmatmul.bf16.gmra.mxu0 %v660
    %v899 = vpop.f32.mrf.mxu0
    %v900 = vadd.f32 0.0, %v899
    %v901 = vpop.f32.mrf.mxu0
    %v902 = vadd.f32 0.0, %v901
    %903 = vmatmul.bf16.gmra.mxu0 %v662
    %v904 = vpop.f32.mrf.mxu0
    %v905 = vadd.f32 0.0, %v904
    %v906 = vpop.f32.mrf.mxu0
    %v907 = vadd.f32 0.0, %v906
    %908 = vmatmul.bf16.gmra.mxu0 %v664
    %v909 = vpop.f32.mrf.mxu0
    %v910 = vadd.f32 0.0, %v909
    %v911 = vpop.f32.mrf.mxu0
    %v912 = vadd.f32 0.0, %v911
    %913 = vmatmul.bf16.gmra.mxu0 %v666
    %v914 = vpop.f32.mrf.mxu0
    %v915 = vadd.f32 0.0, %v914
    %v916 = vpop.f32.mrf.mxu0
    %v917 = vadd.f32 0.0, %v916
    %918 = vmatmul.bf16.gmra.mxu0 %v668
    %v919 = vpop.f32.mrf.mxu0
    %v920 = vadd.f32 0.0, %v919
    %v921 = vpop.f32.mrf.mxu0
    %v922 = vadd.f32 0.0, %v921
    %923 = vmatmul.bf16.gmra.mxu0 %v670
    %v924 = vpop.f32.mrf.mxu0
    %v925 = vadd.f32 0.0, %v924
    %v926 = vpop.f32.mrf.mxu0
    %v927 = vadd.f32 0.0, %v926
    %928 = vmatmul.bf16.gmra.mxu0 %v672
    %v929 = vpop.f32.mrf.mxu0
    %v930 = vadd.f32 0.0, %v929
    %v931 = vpop.f32.mrf.mxu0
    %v932 = vadd.f32 0.0, %v931
    %933 = vmatmul.bf16.gmra.mxu0 %v674
    %v934 = vpop.f32.mrf.mxu0
    %v935 = vadd.f32 0.0, %v934
    %v936 = vpop.f32.mrf.mxu0
    %v937 = vadd.f32 0.0, %v936
    %938 = vmatmul.bf16.gmra.mxu0 %v676
    %v939 = vpop.f32.mrf.mxu0
    %v940 = vadd.f32 0.0, %v939
    %v941 = vpop.f32.mrf.mxu0
    %v942 = vadd.f32 0.0, %v941
    %943 = vmatmul.bf16.gmra.mxu0 %v678
    %v944 = vpop.f32.mrf.mxu0
    %v945 = vadd.f32 0.0, %v944
    %v946 = vpop.f32.mrf.mxu0
    %v947 = vadd.f32 0.0, %v946
    %948 = vmatmul.bf16.gmra.mxu0 %v680
    %v949 = vpop.f32.mrf.mxu0
    %v950 = vadd.f32 0.0, %v949
    %v951 = vpop.f32.mrf.mxu0
    %v952 = vadd.f32 0.0, %v951
    %953 = vmatmul.bf16.gmra.mxu0 %v682
    %v954 = vpop.f32.mrf.mxu0
    %v955 = vadd.f32 0.0, %v954
    %v956 = vpop.f32.mrf.mxu0
    %v957 = vadd.f32 0.0, %v956
    %958 = vmatmul.bf16.gmra.mxu0 %v684
    %v959 = vpop.f32.mrf.mxu0
    %v960 = vadd.f32 0.0, %v959
    %v961 = vpop.f32.mrf.mxu0
    %v962 = vadd.f32 0.0, %v961
    %963 = vmatmul.bf16.gmra.mxu0 %v686
    %v964 = vpop.f32.mrf.mxu0
    %v965 = vadd.f32 0.0, %v964
    %v966 = vpop.f32.mrf.mxu0
    %v967 = vadd.f32 0.0, %v966
    %968 = vdwg.mxu0
    %969 = vmatpush.bf16.msra.mxu0 %v846
    %970 = vmatpush.bf16.msra.mxu0 %v844
    %971 = vmatpush.bf16.msra.mxu0 %v842
    %972 = vmatpush.bf16.msra.mxu0 %v840
    %973 = vmatpush.bf16.msra.mxu0 %v838
    %974 = vmatpush.bf16.msra.mxu0 %v836
    %975 = vmatpush.bf16.msra.mxu0 %v834
    %976 = vmatpush.bf16.msra.mxu0 %v832
    %977 = vmatmul.bf16.gmra.mxu0 %v657
    %v978 = vpop.f32.mrf.mxu0
    %v979 = vadd.f32 %v890, %v978
    %v980 = vpop.f32.mrf.mxu0
    %v981 = vadd.f32 %v892, %v980
    %982 = vmatmul.bf16.gmra.mxu0 %v659
    %v983 = vpop.f32.mrf.mxu0
    %v984 = vadd.f32 %v895, %v983
    %v985 = vpop.f32.mrf.mxu0
    %v986 = vadd.f32 %v897, %v985
    %987 = vmatmul.bf16.gmra.mxu0 %v661
    %v988 = vpop.f32.mrf.mxu0
    %v989 = vadd.f32 %v900, %v988
    %v990 = vpop.f32.mrf.mxu0
    %v991 = vadd.f32 %v902, %v990
    %992 = vmatmul.bf16.gmra.mxu0 %v663
    %v993 = vpop.f32.mrf.mxu0
    %v994 = vadd.f32 %v905, %v993
    %v995 = vpop.f32.mrf.mxu0
    %v996 = vadd.f32 %v907, %v995
    %997 = vmatmul.bf16.gmra.mxu0 %v665
    %v998 = vpop.f32.mrf.mxu0
    %v999 = vadd.f32 %v910, %v998
    %v1000 = vpop.f32.mrf.mxu0
    %v1001 = vadd.f32 %v912, %v1000
    %1002 = vmatmul.bf16.gmra.mxu0 %v667
    %v1003 = vpop.f32.mrf.mxu0
    %v1004 = vadd.f32 %v915, %v1003
    %v1005 = vpop.f32.mrf.mxu0
    %v1006 = vadd.f32 %v917, %v1005
    %1007 = vmatmul.bf16.gmra.mxu0 %v669
    %v1008 = vpop.f32.mrf.mxu0
    %v1009 = vadd.f32 %v920, %v1008
    %v1010 = vpop.f32.mrf.mxu0
    %v1011 = vadd.f32 %v922, %v1010
    %1012 = vmatmul.bf16.gmra.mxu0 %v671
    %v1013 = vpop.f32.mrf.mxu0
    %v1014 = vadd.f32 %v925, %v1013
    %v1015 = vpop.f32.mrf.mxu0
    %v1016 = vadd.f32 %v927, %v1015
    %1017 = vmatmul.bf16.gmra.mxu0 %v673
    %v1018 = vpop.f32.mrf.mxu0
    %v1019 = vadd.f32 %v930, %v1018
    %v1020 = vpop.f32.mrf.mxu0
    %v1021 = vadd.f32 %v932, %v1020
    %1022 = vmatmul.bf16.gmra.mxu0 %v675
    %v1023 = vpop.f32.mrf.mxu0
    %v1024 = vadd.f32 %v935, %v1023
    %v1025 = vpop.f32.mrf.mxu0
    %v1026 = vadd.f32 %v937, %v1025
    %1027 = vmatmul.bf16.gmra.mxu0 %v677
    %v1028 = vpop.f32.mrf.mxu0
    %v1029 = vadd.f32 %v940, %v1028
    %v1030 = vpop.f32.mrf.mxu0
    %v1031 = vadd.f32 %v942, %v1030
    %1032 = vmatmul.bf16.gmra.mxu0 %v679
    %v1033 = vpop.f32.mrf.mxu0
    %v1034 = vadd.f32 %v945, %v1033
    %v1035 = vpop.f32.mrf.mxu0
    %v1036 = vadd.f32 %v947, %v1035
    %1037 = vmatmul.bf16.gmra.mxu0 %v681
    %v1038 = vpop.f32.mrf.mxu0
    %v1039 = vadd.f32 %v950, %v1038
    %v1040 = vpop.f32.mrf.mxu0
    %v1041 = vadd.f32 %v952, %v1040
    %1042 = vmatmul.bf16.gmra.mxu0 %v683
    %v1043 = vpop.f32.mrf.mxu0
    %v1044 = vadd.f32 %v955, %v1043
    %v1045 = vpop.f32.mrf.mxu0
    %v1046 = vadd.f32 %v957, %v1045
    %1047 = vmatmul.bf16.gmra.mxu0 %v685
    %v1048 = vpop.f32.mrf.mxu0
    %v1049 = vadd.f32 %v960, %v1048
    %v1050 = vpop.f32.mrf.mxu0
    %v1051 = vadd.f32 %v962, %v1050
    %1052 = vmatmul.bf16.gmra.mxu0 %v687
    %v1053 = vpop.f32.mrf.mxu0
    %v1054 = vadd.f32 %v965, %v1053
    %v1055 = vpop.f32.mrf.mxu0
    %v1056 = vadd.f32 %v967, %v1055
    %1057 = vdwg.mxu0
    %1058 = vmatpush.bf16.msra.mxu0 %v831
    %1059 = vmatpush.bf16.msra.mxu0 %v829
    %1060 = vmatpush.bf16.msra.mxu0 %v827
    %1061 = vmatpush.bf16.msra.mxu0 %v825
    %1062 = vmatpush.bf16.msra.mxu0 %v823
    %1063 = vmatpush.bf16.msra.mxu0 %v821
    %1064 = vmatpush.bf16.msra.mxu0 %v819
    %1065 = vmatpush.bf16.msra.mxu0 %v817
    %1066 = vmatmul.bf16.gmra.mxu0 %v656
    %v1067 = vpop.f32.mrf.mxu0
    %v1068 = vadd.f32 0.0, %v1067
    %v1069 = vpop.f32.mrf.mxu0
    %v1070 = vadd.f32 0.0, %v1069
    %1071 = vmatmul.bf16.gmra.mxu0 %v658
    %v1072 = vpop.f32.mrf.mxu0
    %v1073 = vadd.f32 0.0, %v1072
    %v1074 = vpop.f32.mrf.mxu0
    %v1075 = vadd.f32 0.0, %v1074
    %1076 = vmatmul.bf16.gmra.mxu0 %v660
    %v1077 = vpop.f32.mrf.mxu0
    %v1078 = vadd.f32 0.0, %v1077
    %v1079 = vpop.f32.mrf.mxu0
    %v1080 = vadd.f32 0.0, %v1079
    %1081 = vmatmul.bf16.gmra.mxu0 %v662
    %v1082 = vpop.f32.mrf.mxu0
    %v1083 = vadd.f32 0.0, %v1082
    %v1084 = vpop.f32.mrf.mxu0
    %v1085 = vadd.f32 0.0, %v1084
    %1086 = vmatmul.bf16.gmra.mxu0 %v664
    %v1087 = vpop.f32.mrf.mxu0
    %v1088 = vadd.f32 0.0, %v1087
    %v1089 = vpop.f32.mrf.mxu0
    %v1090 = vadd.f32 0.0, %v1089
    %1091 = vmatmul.bf16.gmra.mxu0 %v666
    %v1092 = vpop.f32.mrf.mxu0
    %v1093 = vadd.f32 0.0, %v1092
    %v1094 = vpop.f32.mrf.mxu0
    %v1095 = vadd.f32 0.0, %v1094
    %1096 = vmatmul.bf16.gmra.mxu0 %v668
    %v1097 = vpop.f32.mrf.mxu0
    %v1098 = vadd.f32 0.0, %v1097
    %v1099 = vpop.f32.mrf.mxu0
    %v1100 = vadd.f32 0.0, %v1099
    %1101 = vmatmul.bf16.gmra.mxu0 %v670
    %v1102 = vpop.f32.mrf.mxu0
    %v1103 = vadd.f32 0.0, %v1102
    %v1104 = vpop.f32.mrf.mxu0
    %v1105 = vadd.f32 0.0, %v1104
    %1106 = vmatmul.bf16.gmra.mxu0 %v672
    %v1107 = vpop.f32.mrf.mxu0
    %v1108 = vadd.f32 0.0, %v1107
    %v1109 = vpop.f32.mrf.mxu0
    %v1110 = vadd.f32 0.0, %v1109
    %1111 = vmatmul.bf16.gmra.mxu0 %v674
    %v1112 = vpop.f32.mrf.mxu0
    %v1113 = vadd.f32 0.0, %v1112
    %v1114 = vpop.f32.mrf.mxu0
    %v1115 = vadd.f32 0.0, %v1114
    %1116 = vmatmul.bf16.gmra.mxu0 %v676
    %v1117 = vpop.f32.mrf.mxu0
    %v1118 = vadd.f32 0.0, %v1117
    %v1119 = vpop.f32.mrf.mxu0
    %v1120 = vadd.f32 0.0, %v1119
    %1121 = vmatmul.bf16.gmra.mxu0 %v678
    %v1122 = vpop.f32.mrf.mxu0
    %v1123 = vadd.f32 0.0, %v1122
    %v1124 = vpop.f32.mrf.mxu0
    %v1125 = vadd.f32 0.0, %v1124
    %1126 = vmatmul.bf16.gmra.mxu0 %v680
    %v1127 = vpop.f32.mrf.mxu0
    %v1128 = vadd.f32 0.0, %v1127
    %v1129 = vpop.f32.mrf.mxu0
    %v1130 = vadd.f32 0.0, %v1129
    %1131 = vmatmul.bf16.gmra.mxu0 %v682
    %v1132 = vpop.f32.mrf.mxu0
    %v1133 = vadd.f32 0.0, %v1132
    %v1134 = vpop.f32.mrf.mxu0
    %v1135 = vadd.f32 0.0, %v1134
    %1136 = vmatmul.bf16.gmra.mxu0 %v684
    %v1137 = vpop.f32.mrf.mxu0
    %v1138 = vadd.f32 0.0, %v1137
    %v1139 = vpop.f32.mrf.mxu0
    %v1140 = vadd.f32 0.0, %v1139
    %1141 = vmatmul.bf16.gmra.mxu0 %v686
    %v1142 = vpop.f32.mrf.mxu0
    %v1143 = vadd.f32 0.0, %v1142
    %v1144 = vpop.f32.mrf.mxu0
    %v1145 = vadd.f32 0.0, %v1144
    %1146 = vdwg.mxu0
    %1147 = vmatpush.bf16.msra.mxu0 %v847
    %1148 = vmatpush.bf16.msra.mxu0 %v845
    %1149 = vmatpush.bf16.msra.mxu0 %v843
    %1150 = vmatpush.bf16.msra.mxu0 %v841
    %1151 = vmatpush.bf16.msra.mxu0 %v839
    %1152 = vmatpush.bf16.msra.mxu0 %v837
    %1153 = vmatpush.bf16.msra.mxu0 %v835
    %1154 = vmatpush.bf16.msra.mxu0 %v833
    %1155 = vmatmul.bf16.gmra.mxu0 %v657
    %v1156 = vpop.f32.mrf.mxu0
    %v1157 = vadd.f32 %v1068, %v1156
    %v1158 = vpop.f32.mrf.mxu0
    %v1159 = vadd.f32 %v1070, %v1158
    %1160 = vmatmul.bf16.gmra.mxu0 %v659
    %v1161 = vpop.f32.mrf.mxu0
    %v1162 = vadd.f32 %v1073, %v1161
    %v1163 = vpop.f32.mrf.mxu0
    %v1164 = vadd.f32 %v1075, %v1163
    %1165 = vmatmul.bf16.gmra.mxu0 %v661
    %v1166 = vpop.f32.mrf.mxu0
    %v1167 = vadd.f32 %v1078, %v1166
    %v1168 = vpop.f32.mrf.mxu0
    %v1169 = vadd.f32 %v1080, %v1168
    %1170 = vmatmul.bf16.gmra.mxu0 %v663
    %v1171 = vpop.f32.mrf.mxu0
    %v1172 = vadd.f32 %v1083, %v1171
    %v1173 = vpop.f32.mrf.mxu0
    %v1174 = vadd.f32 %v1085, %v1173
    %1175 = vmatmul.bf16.gmra.mxu0 %v665
    %v1176 = vpop.f32.mrf.mxu0
    %v1177 = vadd.f32 %v1088, %v1176
    %v1178 = vpop.f32.mrf.mxu0
    %v1179 = vadd.f32 %v1090, %v1178
    %1180 = vmatmul.bf16.gmra.mxu0 %v667
    %v1181 = vpop.f32.mrf.mxu0
    %v1182 = vadd.f32 %v1093, %v1181
    %v1183 = vpop.f32.mrf.mxu0
    %v1184 = vadd.f32 %v1095, %v1183
    %1185 = vmatmul.bf16.gmra.mxu0 %v669
    %v1186 = vpop.f32.mrf.mxu0
    %v1187 = vadd.f32 %v1098, %v1186
    %v1188 = vpop.f32.mrf.mxu0
    %v1189 = vadd.f32 %v1100, %v1188
    %1190 = vmatmul.bf16.gmra.mxu0 %v671
    %v1191 = vpop.f32.mrf.mxu0
    %v1192 = vadd.f32 %v1103, %v1191
    %v1193 = vpop.f32.mrf.mxu0
    %v1194 = vadd.f32 %v1105, %v1193
    %1195 = vmatmul.bf16.gmra.mxu0 %v673
    %v1196 = vpop.f32.mrf.mxu0
    %v1197 = vadd.f32 %v1108, %v1196
    %v1198 = vpop.f32.mrf.mxu0
    %v1199 = vadd.f32 %v1110, %v1198
    %1200 = vmatmul.bf16.gmra.mxu0 %v675
    %v1201 = vpop.f32.mrf.mxu0
    %v1202 = vadd.f32 %v1113, %v1201
    %v1203 = vpop.f32.mrf.mxu0
    %v1204 = vadd.f32 %v1115, %v1203
    %1205 = vmatmul.bf16.gmra.mxu0 %v677
    %v1206 = vpop.f32.mrf.mxu0
    %v1207 = vadd.f32 %v1118, %v1206
    %v1208 = vpop.f32.mrf.mxu0
    %v1209 = vadd.f32 %v1120, %v1208
    %1210 = vmatmul.bf16.gmra.mxu0 %v679
    %v1211 = vpop.f32.mrf.mxu0
    %v1212 = vadd.f32 %v1123, %v1211
    %v1213 = vpop.f32.mrf.mxu0
    %v1214 = vadd.f32 %v1125, %v1213
    %1215 = vmatmul.bf16.gmra.mxu0 %v681
    %v1216 = vpop.f32.mrf.mxu0
    %v1217 = vadd.f32 %v1128, %v1216
    %v1218 = vpop.f32.mrf.mxu0
    %v1219 = vadd.f32 %v1130, %v1218
    %1220 = vmatmul.bf16.gmra.mxu0 %v683
    %v1221 = vpop.f32.mrf.mxu0
    %v1222 = vadd.f32 %v1133, %v1221
    %v1223 = vpop.f32.mrf.mxu0
    %v1224 = vadd.f32 %v1135, %v1223
    %1225 = vmatmul.bf16.gmra.mxu0 %v685
    %v1226 = vpop.f32.mrf.mxu0
    %v1227 = vadd.f32 %v1138, %v1226
    %v1228 = vpop.f32.mrf.mxu0
    %v1229 = vadd.f32 %v1140, %v1228
    %1230 = vmatmul.bf16.gmra.mxu0 %v687
    %v1231 = vpop.f32.mrf.mxu0
    %v1232 = vadd.f32 %v1143, %v1231
    %v1233 = vpop.f32.mrf.mxu0
    %v1234 = vadd.f32 %v1145, %v1233
    %1235 = vdwg.mxu0
    %v1236 = vld [vmem:[%s3] sm:$0x1]
    %v1238 = vperm.slane %v1236, 0
    %v1240 = vadd.f32 %v979, %v1238
    %v1241 = vadd.f32 %v981, %v1238
    %v1242 = vadd.f32 %v984, %v1238
    %v1243 = vadd.f32 %v986, %v1238
    %v1244 = vadd.f32 %v989, %v1238
    %v1245 = vadd.f32 %v991, %v1238
    %v1246 = vadd.f32 %v994, %v1238
    %v1247 = vadd.f32 %v996, %v1238
    %v1248 = vadd.f32 %v999, %v1238
    %v1249 = vadd.f32 %v1001, %v1238
    %v1250 = vadd.f32 %v1004, %v1238
    %v1251 = vadd.f32 %v1006, %v1238
    %v1252 = vadd.f32 %v1009, %v1238
    %v1253 = vadd.f32 %v1011, %v1238
    %v1254 = vadd.f32 %v1014, %v1238
    %v1255 = vadd.f32 %v1016, %v1238
    %v1256 = vadd.f32 %v1019, %v1238
    %v1257 = vadd.f32 %v1021, %v1238
    %v1258 = vadd.f32 %v1024, %v1238
    %v1259 = vadd.f32 %v1026, %v1238
    %v1260 = vadd.f32 %v1029, %v1238
    %v1261 = vadd.f32 %v1031, %v1238
    %v1262 = vadd.f32 %v1034, %v1238
    %v1263 = vadd.f32 %v1036, %v1238
    %v1264 = vadd.f32 %v1039, %v1238
    %v1265 = vadd.f32 %v1041, %v1238
    %v1266 = vadd.f32 %v1044, %v1238
    %v1267 = vadd.f32 %v1046, %v1238
    %v1268 = vadd.f32 %v1049, %v1238
    %v1269 = vadd.f32 %v1051, %v1238
    %v1270 = vadd.f32 %v1054, %v1238
    %v1271 = vadd.f32 %v1056, %v1238
    %v1272 = vmax.f32 %v1240, 0.0
    %v1273 = vmax.f32 %v1241, 0.0
    %v1274 = vmax.f32 %v1242, 0.0
    %v1275 = vmax.f32 %v1243, 0.0
    %v1276 = vmax.f32 %v1244, 0.0
    %v1277 = vmax.f32 %v1245, 0.0
    %v1278 = vmax.f32 %v1246, 0.0
    %v1279 = vmax.f32 %v1247, 0.0
    %v1280 = vmax.f32 %v1248, 0.0
    %v1281 = vmax.f32 %v1249, 0.0
    %v1282 = vmax.f32 %v1250, 0.0
    %v1283 = vmax.f32 %v1251, 0.0
    %v1284 = vmax.f32 %v1252, 0.0
    %v1285 = vmax.f32 %v1253, 0.0
    %v1286 = vmax.f32 %v1254, 0.0
    %v1287 = vmax.f32 %v1255, 0.0
    %v1288 = vmax.f32 %v1256, 0.0
    %v1289 = vmax.f32 %v1257, 0.0
    %v1290 = vmax.f32 %v1258, 0.0
    %v1291 = vmax.f32 %v1259, 0.0
    %v1292 = vmax.f32 %v1260, 0.0
    %v1293 = vmax.f32 %v1261, 0.0
    %v1294 = vmax.f32 %v1262, 0.0
    %v1295 = vmax.f32 %v1263, 0.0
    %v1296 = vmax.f32 %v1264, 0.0
    %v1297 = vmax.f32 %v1265, 0.0
    %v1298 = vmax.f32 %v1266, 0.0
    %v1299 = vmax.f32 %v1267, 0.0
    %v1300 = vmax.f32 %v1268, 0.0
    %v1301 = vmax.f32 %v1269, 0.0
    %v1302 = vmax.f32 %v1270, 0.0
    %v1303 = vmax.f32 %v1271, 0.0
    %v1304 = vpack.c.bf16 %v1273, %v1272
    %v1305 = vpack.c.bf16 %v1275, %v1274
    %v1306 = vpack.c.bf16 %v1277, %v1276
    %v1307 = vpack.c.bf16 %v1279, %v1278
    %v1308 = vpack.c.bf16 %v1281, %v1280
    %v1309 = vpack.c.bf16 %v1283, %v1282
    %v1310 = vpack.c.bf16 %v1285, %v1284
    %v1311 = vpack.c.bf16 %v1287, %v1286
    %v1312 = vpack.c.bf16 %v1289, %v1288
    %v1313 = vpack.c.bf16 %v1291, %v1290
    %v1314 = vpack.c.bf16 %v1293, %v1292
    %v1315 = vpack.c.bf16 %v1295, %v1294
    %v1316 = vpack.c.bf16 %v1297, %v1296
    %v1317 = vpack.c.bf16 %v1299, %v1298
    %v1318 = vpack.c.bf16 %v1301, %v1300
    %v1319 = vpack.c.bf16 %v1303, %v1302
    %1320 = vmatpush.bf16.msra.mxu0 %v1311
    %1321 = vmatpush.bf16.msra.mxu0 %v1310
    %1322 = vmatpush.bf16.msra.mxu0 %v1309
    %1323 = vmatpush.bf16.msra.mxu0 %v1308
    %1324 = vmatpush.bf16.msra.mxu0 %v1307
    %1325 = vmatpush.bf16.msra.mxu0 %v1306
    %1326 = vmatpush.bf16.msra.mxu0 %v1305
    %1327 = vmatpush.bf16.msra.mxu0 %v1304
    %1328 = vmatmul.bf16.gmra.mxu0 %v172
    %v1329 = vpop.f32.mrf.mxu0
    %v1330 = vadd.f32 0.0, %v1329
    %v1331 = vpop.f32.mrf.mxu0
    %v1332 = vadd.f32 0.0, %v1331
    %1333 = vmatmul.bf16.gmra.mxu0 %v174
    %v1334 = vpop.f32.mrf.mxu0
    %v1335 = vadd.f32 0.0, %v1334
    %v1336 = vpop.f32.mrf.mxu0
    %v1337 = vadd.f32 0.0, %v1336
    %1338 = vmatmul.bf16.gmra.mxu0 %v176
    %v1339 = vpop.f32.mrf.mxu0
    %v1340 = vadd.f32 0.0, %v1339
    %v1341 = vpop.f32.mrf.mxu0
    %v1342 = vadd.f32 0.0, %v1341
    %1343 = vmatmul.bf16.gmra.mxu0 %v178
    %v1344 = vpop.f32.mrf.mxu0
    %v1345 = vadd.f32 0.0, %v1344
    %v1346 = vpop.f32.mrf.mxu0
    %v1347 = vadd.f32 0.0, %v1346
    %1348 = vmatmul.bf16.gmra.mxu0 %v180
    %v1349 = vpop.f32.mrf.mxu0
    %v1350 = vadd.f32 0.0, %v1349
    %v1351 = vpop.f32.mrf.mxu0
    %v1352 = vadd.f32 0.0, %v1351
    %1353 = vmatmul.bf16.gmra.mxu0 %v182
    %v1354 = vpop.f32.mrf.mxu0
    %v1355 = vadd.f32 0.0, %v1354
    %v1356 = vpop.f32.mrf.mxu0
    %v1357 = vadd.f32 0.0, %v1356
    %1358 = vmatmul.bf16.gmra.mxu0 %v184
    %v1359 = vpop.f32.mrf.mxu0
    %v1360 = vadd.f32 0.0, %v1359
    %v1361 = vpop.f32.mrf.mxu0
    %v1362 = vadd.f32 0.0, %v1361
    %1363 = vmatmul.bf16.gmra.mxu0 %v186
    %v1364 = vpop.f32.mrf.mxu0
    %v1365 = vadd.f32 0.0, %v1364
    %v1366 = vpop.f32.mrf.mxu0
    %v1367 = vadd.f32 0.0, %v1366
    %1368 = vmatmul.bf16.gmra.mxu0 %v188
    %v1369 = vpop.f32.mrf.mxu0
    %v1370 = vadd.f32 0.0, %v1369
    %v1371 = vpop.f32.mrf.mxu0
    %v1372 = vadd.f32 0.0, %v1371
    %1373 = vmatmul.bf16.gmra.mxu0 %v190
    %v1374 = vpop.f32.mrf.mxu0
    %v1375 = vadd.f32 0.0, %v1374
    %v1376 = vpop.f32.mrf.mxu0
    %v1377 = vadd.f32 0.0, %v1376
    %1378 = vmatmul.bf16.gmra.mxu0 %v192
    %v1379 = vpop.f32.mrf.mxu0
    %v1380 = vadd.f32 0.0, %v1379
    %v1381 = vpop.f32.mrf.mxu0
    %v1382 = vadd.f32 0.0, %v1381
    %1383 = vmatmul.bf16.gmra.mxu0 %v194
    %v1384 = vpop.f32.mrf.mxu0
    %v1385 = vadd.f32 0.0, %v1384
    %v1386 = vpop.f32.mrf.mxu0
    %v1387 = vadd.f32 0.0, %v1386
    %1388 = vmatmul.bf16.gmra.mxu0 %v196
    %v1389 = vpop.f32.mrf.mxu0
    %v1390 = vadd.f32 0.0, %v1389
    %v1391 = vpop.f32.mrf.mxu0
    %v1392 = vadd.f32 0.0, %v1391
    %1393 = vmatmul.bf16.gmra.mxu0 %v198
    %v1394 = vpop.f32.mrf.mxu0
    %v1395 = vadd.f32 0.0, %v1394
    %v1396 = vpop.f32.mrf.mxu0
    %v1397 = vadd.f32 0.0, %v1396
    %1398 = vmatmul.bf16.gmra.mxu0 %v200
    %v1399 = vpop.f32.mrf.mxu0
    %v1400 = vadd.f32 0.0, %v1399
    %v1401 = vpop.f32.mrf.mxu0
    %v1402 = vadd.f32 0.0, %v1401
    %1403 = vmatmul.bf16.gmra.mxu0 %v202
    %v1404 = vpop.f32.mrf.mxu0
    %v1405 = vadd.f32 0.0, %v1404
    %v1406 = vpop.f32.mrf.mxu0
    %v1407 = vadd.f32 0.0, %v1406
    %1408 = vdwg.mxu0
    %1409 = vmatpush.bf16.msra.mxu0 %v1319
    %1410 = vmatpush.bf16.msra.mxu0 %v1318
    %1411 = vmatpush.bf16.msra.mxu0 %v1317
    %1412 = vmatpush.bf16.msra.mxu0 %v1316
    %1413 = vmatpush.bf16.msra.mxu0 %v1315
    %1414 = vmatpush.bf16.msra.mxu0 %v1314
    %1415 = vmatpush.bf16.msra.mxu0 %v1313
    %1416 = vmatpush.bf16.msra.mxu0 %v1312
    %1417 = vmatmul.bf16.gmra.mxu0 %v173
    %v1418 = vpop.f32.mrf.mxu0
    %v1419 = vadd.f32 %v1330, %v1418
    %v1420 = vpop.f32.mrf.mxu0
    %v1421 = vadd.f32 %v1332, %v1420
    %1422 = vmatmul.bf16.gmra.mxu0 %v175
    %v1423 = vpop.f32.mrf.mxu0
    %v1424 = vadd.f32 %v1335, %v1423
    %v1425 = vpop.f32.mrf.mxu0
    %v1426 = vadd.f32 %v1337, %v1425
    %1427 = vmatmul.bf16.gmra.mxu0 %v177
    %v1428 = vpop.f32.mrf.mxu0
    %v1429 = vadd.f32 %v1340, %v1428
    %v1430 = vpop.f32.mrf.mxu0
    %v1431 = vadd.f32 %v1342, %v1430
    %1432 = vmatmul.bf16.gmra.mxu0 %v179
    %v1433 = vpop.f32.mrf.mxu0
    %v1434 = vadd.f32 %v1345, %v1433
    %v1435 = vpop.f32.mrf.mxu0
    %v1436 = vadd.f32 %v1347, %v1435
    %1437 = vmatmul.bf16.gmra.mxu0 %v181
    %v1438 = vpop.f32.mrf.mxu0
    %v1439 = vadd.f32 %v1350, %v1438
    %v1440 = vpop.f32.mrf.mxu0
    %v1441 = vadd.f32 %v1352, %v1440
    %1442 = vmatmul.bf16.gmra.mxu0 %v183
    %v1443 = vpop.f32.mrf.mxu0
    %v1444 = vadd.f32 %v1355, %v1443
    %v1445 = vpop.f32.mrf.mxu0
    %v1446 = vadd.f32 %v1357, %v1445
    %1447 = vmatmul.bf16.gmra.mxu0 %v185
    %v1448 = vpop.f32.mrf.mxu0
    %v1449 = vadd.f32 %v1360, %v1448
    %v1450 = vpop.f32.mrf.mxu0
    %v1451 = vadd.f32 %v1362, %v1450
    %1452 = vmatmul.bf16.gmra.mxu0 %v187
    %v1453 = vpop.f32.mrf.mxu0
    %v1454 = vadd.f32 %v1365, %v1453
    %v1455 = vpop.f32.mrf.mxu0
    %v1456 = vadd.f32 %v1367, %v1455
    %1457 = vmatmul.bf16.gmra.mxu0 %v189
    %v1458 = vpop.f32.mrf.mxu0
    %v1459 = vadd.f32 %v1370, %v1458
    %v1460 = vpop.f32.mrf.mxu0
    %v1461 = vadd.f32 %v1372, %v1460
    %1462 = vmatmul.bf16.gmra.mxu0 %v191
    %v1463 = vpop.f32.mrf.mxu0
    %v1464 = vadd.f32 %v1375, %v1463
    %v1465 = vpop.f32.mrf.mxu0
    %v1466 = vadd.f32 %v1377, %v1465
    %1467 = vmatmul.bf16.gmra.mxu0 %v193
    %v1468 = vpop.f32.mrf.mxu0
    %v1469 = vadd.f32 %v1380, %v1468
    %v1470 = vpop.f32.mrf.mxu0
    %v1471 = vadd.f32 %v1382, %v1470
    %1472 = vmatmul.bf16.gmra.mxu0 %v195
    %v1473 = vpop.f32.mrf.mxu0
    %v1474 = vadd.f32 %v1385, %v1473
    %v1475 = vpop.f32.mrf.mxu0
    %v1476 = vadd.f32 %v1387, %v1475
    %1477 = vmatmul.bf16.gmra.mxu0 %v197
    %v1478 = vpop.f32.mrf.mxu0
    %v1479 = vadd.f32 %v1390, %v1478
    %v1480 = vpop.f32.mrf.mxu0
    %v1481 = vadd.f32 %v1392, %v1480
    %1482 = vmatmul.bf16.gmra.mxu0 %v199
    %v1483 = vpop.f32.mrf.mxu0
    %v1484 = vadd.f32 %v1395, %v1483
    %v1485 = vpop.f32.mrf.mxu0
    %v1486 = vadd.f32 %v1397, %v1485
    %1487 = vmatmul.bf16.gmra.mxu0 %v201
    %v1488 = vpop.f32.mrf.mxu0
    %v1489 = vadd.f32 %v1400, %v1488
    %v1490 = vpop.f32.mrf.mxu0
    %v1491 = vadd.f32 %v1402, %v1490
    %1492 = vmatmul.bf16.gmra.mxu0 %v203
    %v1493 = vpop.f32.mrf.mxu0
    %v1494 = vadd.f32 %v1405, %v1493
    %v1495 = vpop.f32.mrf.mxu0
    %v1496 = vadd.f32 %v1407, %v1495
    %1497 = vdwg.mxu0
    %v1498 = vpack.c.bf16 %v1421, %v1419
    %v1499 = vpack.c.bf16 %v1426, %v1424
    %v1500 = vpack.c.bf16 %v1431, %v1429
    %v1501 = vpack.c.bf16 %v1436, %v1434
    %v1502 = vpack.c.bf16 %v1441, %v1439
    %v1503 = vpack.c.bf16 %v1446, %v1444
    %v1504 = vpack.c.bf16 %v1451, %v1449
    %v1505 = vpack.c.bf16 %v1456, %v1454
    %v1506 = vpack.c.bf16 %v1461, %v1459
    %v1507 = vpack.c.bf16 %v1466, %v1464
    %v1508 = vpack.c.bf16 %v1471, %v1469
    %v1509 = vpack.c.bf16 %v1476, %v1474
    %v1510 = vpack.c.bf16 %v1481, %v1479
    %v1511 = vpack.c.bf16 %v1486, %v1484
    %v1512 = vpack.c.bf16 %v1491, %v1489
    %v1513 = vpack.c.bf16 %v1496, %v1494
    %v1514 = vld [vmem:[#allocation8] sm:$0xf]
    %v1515 = vld [vmem:[#allocation8 + $0x4] sm:$0xf]
    %v1516 = vld [vmem:[#allocation8 + $0x8] sm:$0xf]
    %v1517 = vld [vmem:[#allocation8 + $0xc] sm:$0xf]
    %v1518 = vld [vmem:[#allocation8 + $0x10] sm:$0xf]
    %v1519 = vld [vmem:[#allocation8 + $0x14] sm:$0xf]
    %v1520 = vld [vmem:[#allocation8 + $0x18] sm:$0xf]
    %v1521 = vld [vmem:[#allocation8 + $0x1c] sm:$0xf]
    %v1522 = vld [vmem:[#allocation8 + $0x20] sm:$0xf]
    %v1523 = vld [vmem:[#allocation8 + $0x24] sm:$0xf]
    %v1524 = vld [vmem:[#allocation8 + $0x28] sm:$0xf]
    %v1525 = vld [vmem:[#allocation8 + $0x2c] sm:$0xf]
    %v1526 = vld [vmem:[#allocation8 + $0x30] sm:$0xf]
    %v1527 = vld [vmem:[#allocation8 + $0x34] sm:$0xf]
    %v1528 = vld [vmem:[#allocation8 + $0x38] sm:$0xf]
    %v1529 = vld [vmem:[#allocation8 + $0x3c] sm:$0xf]
    %v1546 = vunpack.c.l.b16 %v1514
    %v1547 = vunpack.c.l.b16 %v1515
    %v1548 = vunpack.c.l.b16 %v1516
    %v1549 = vunpack.c.l.b16 %v1517
    %v1550 = vunpack.c.l.b16 %v1518
    %v1551 = vunpack.c.l.b16 %v1519
    %v1552 = vunpack.c.l.b16 %v1520
    %v1553 = vunpack.c.l.b16 %v1521
    %v1554 = vunpack.c.l.b16 %v1522
    %v1555 = vunpack.c.l.b16 %v1523
    %v1556 = vunpack.c.l.b16 %v1524
    %v1557 = vunpack.c.l.b16 %v1525
    %v1558 = vunpack.c.l.b16 %v1526
    %v1559 = vunpack.c.l.b16 %v1527
    %v1560 = vunpack.c.l.b16 %v1528
    %v1561 = vunpack.c.l.b16 %v1529
    %v1562 = vpack.c.b16 %v1547, %v1546
    %v1563 = vpack.c.b16 %v1549, %v1548
    %v1564 = vpack.c.b16 %v1551, %v1550
    %v1565 = vpack.c.b16 %v1553, %v1552
    %v1566 = vpack.c.b16 %v1555, %v1554
    %v1567 = vpack.c.b16 %v1557, %v1556
    %v1568 = vpack.c.b16 %v1559, %v1558
    %v1569 = vpack.c.b16 %v1561, %v1560
    %1578 = vmatpush.bf16.msra.mxu0 %v1569
    %1579 = vmatpush.bf16.msra.mxu0 %v1568
    %1580 = vmatpush.bf16.msra.mxu0 %v1567
    %1581 = vmatpush.bf16.msra.mxu0 %v1566
    %1582 = vmatpush.bf16.msra.mxu0 %v1565
    %1583 = vmatpush.bf16.msra.mxu0 %v1564
    %1584 = vmatpush.bf16.msra.mxu0 %v1563
    %1585 = vmatpush.bf16.msra.mxu0 %v1562
    %1586 = vmatmul.bf16.gmra.mxu0 %v1498
    %v1587 = vpop.f32.mrf.mxu0
    %v1588 = vadd.f32 %v1157, %v1587
    %v1589 = vpop.f32.mrf.mxu0
    %v1590 = vadd.f32 %v1159, %v1589
    %1591 = vmatmul.bf16.gmra.mxu0 %v1499
    %v1592 = vpop.f32.mrf.mxu0
    %v1593 = vadd.f32 %v1162, %v1592
    %v1594 = vpop.f32.mrf.mxu0
    %v1595 = vadd.f32 %v1164, %v1594
    %1596 = vmatmul.bf16.gmra.mxu0 %v1500
    %v1597 = vpop.f32.mrf.mxu0
    %v1598 = vadd.f32 %v1167, %v1597
    %v1599 = vpop.f32.mrf.mxu0
    %v1600 = vadd.f32 %v1169, %v1599
    %1601 = vmatmul.bf16.gmra.mxu0 %v1501
    %v1602 = vpop.f32.mrf.mxu0
    %v1603 = vadd.f32 %v1172, %v1602
    %v1604 = vpop.f32.mrf.mxu0
    %v1605 = vadd.f32 %v1174, %v1604
    %1606 = vmatmul.bf16.gmra.mxu0 %v1502
    %v1607 = vpop.f32.mrf.mxu0
    %v1608 = vadd.f32 %v1177, %v1607
    %v1609 = vpop.f32.mrf.mxu0
    %v1610 = vadd.f32 %v1179, %v1609
    %1611 = vmatmul.bf16.gmra.mxu0 %v1503
    %v1612 = vpop.f32.mrf.mxu0
    %v1613 = vadd.f32 %v1182, %v1612
    %v1614 = vpop.f32.mrf.mxu0
    %v1615 = vadd.f32 %v1184, %v1614
    %1616 = vmatmul.bf16.gmra.mxu0 %v1504
    %v1617 = vpop.f32.mrf.mxu0
    %v1618 = vadd.f32 %v1187, %v1617
    %v1619 = vpop.f32.mrf.mxu0
    %v1620 = vadd.f32 %v1189, %v1619
    %1621 = vmatmul.bf16.gmra.mxu0 %v1505
    %v1622 = vpop.f32.mrf.mxu0
    %v1623 = vadd.f32 %v1192, %v1622
    %v1624 = vpop.f32.mrf.mxu0
    %v1625 = vadd.f32 %v1194, %v1624
    %1626 = vmatmul.bf16.gmra.mxu0 %v1506
    %v1627 = vpop.f32.mrf.mxu0
    %v1628 = vadd.f32 %v1197, %v1627
    %v1629 = vpop.f32.mrf.mxu0
    %v1630 = vadd.f32 %v1199, %v1629
    %1631 = vmatmul.bf16.gmra.mxu0 %v1507
    %v1632 = vpop.f32.mrf.mxu0
    %v1633 = vadd.f32 %v1202, %v1632
    %v1634 = vpop.f32.mrf.mxu0
    %v1635 = vadd.f32 %v1204, %v1634
    %1636 = vmatmul.bf16.gmra.mxu0 %v1508
    %v1637 = vpop.f32.mrf.mxu0
    %v1638 = vadd.f32 %v1207, %v1637
    %v1639 = vpop.f32.mrf.mxu0
    %v1640 = vadd.f32 %v1209, %v1639
    %1641 = vmatmul.bf16.gmra.mxu0 %v1509
    %v1642 = vpop.f32.mrf.mxu0
    %v1643 = vadd.f32 %v1212, %v1642
    %v1644 = vpop.f32.mrf.mxu0
    %v1645 = vadd.f32 %v1214, %v1644
    %1646 = vmatmul.bf16.gmra.mxu0 %v1510
    %v1647 = vpop.f32.mrf.mxu0
    %v1648 = vadd.f32 %v1217, %v1647
    %v1649 = vpop.f32.mrf.mxu0
    %v1650 = vadd.f32 %v1219, %v1649
    %1651 = vmatmul.bf16.gmra.mxu0 %v1511
    %v1652 = vpop.f32.mrf.mxu0
    %v1653 = vadd.f32 %v1222, %v1652
    %v1654 = vpop.f32.mrf.mxu0
    %v1655 = vadd.f32 %v1224, %v1654
    %1656 = vmatmul.bf16.gmra.mxu0 %v1512
    %v1657 = vpop.f32.mrf.mxu0
    %v1658 = vadd.f32 %v1227, %v1657
    %v1659 = vpop.f32.mrf.mxu0
    %v1660 = vadd.f32 %v1229, %v1659
    %1661 = vmatmul.bf16.gmra.mxu0 %v1513
    %v1662 = vpop.f32.mrf.mxu0
    %v1663 = vadd.f32 %v1232, %v1662
    %v1664 = vpop.f32.mrf.mxu0
    %v1665 = vadd.f32 %v1234, %v1664
    %1666 = vdwg.mxu0
    %v1667 = vld [vmem:[%s5] sm:$0x1]
    %v1669 = vperm.slane %v1667, 0
    %v1671 = vadd.f32 %v1588, %v1669
    %v1672 = vadd.f32 %v1590, %v1669
    %v1673 = vadd.f32 %v1593, %v1669
    %v1674 = vadd.f32 %v1595, %v1669
    %v1675 = vadd.f32 %v1598, %v1669
    %v1676 = vadd.f32 %v1600, %v1669
    %v1677 = vadd.f32 %v1603, %v1669
    %v1678 = vadd.f32 %v1605, %v1669
    %v1679 = vadd.f32 %v1608, %v1669
    %v1680 = vadd.f32 %v1610, %v1669
    %v1681 = vadd.f32 %v1613, %v1669
    %v1682 = vadd.f32 %v1615, %v1669
    %v1683 = vadd.f32 %v1618, %v1669
    %v1684 = vadd.f32 %v1620, %v1669
    %v1685 = vadd.f32 %v1623, %v1669
    %v1686 = vadd.f32 %v1625, %v1669
    %v1687 = vadd.f32 %v1628, %v1669
    %v1688 = vadd.f32 %v1630, %v1669
    %v1689 = vadd.f32 %v1633, %v1669
    %v1690 = vadd.f32 %v1635, %v1669
    %v1691 = vadd.f32 %v1638, %v1669
    %v1692 = vadd.f32 %v1640, %v1669
    %v1693 = vadd.f32 %v1643, %v1669
    %v1694 = vadd.f32 %v1645, %v1669
    %v1695 = vadd.f32 %v1648, %v1669
    %v1696 = vadd.f32 %v1650, %v1669
    %v1697 = vadd.f32 %v1653, %v1669
    %v1698 = vadd.f32 %v1655, %v1669
    %v1699 = vadd.f32 %v1658, %v1669
    %v1700 = vadd.f32 %v1660, %v1669
    %v1701 = vadd.f32 %v1663, %v1669
    %v1702 = vadd.f32 %v1665, %v1669
    %v1703 = vmax.f32 %v1671, 0.0
    %v1704 = vmax.f32 %v1672, 0.0
    %v1705 = vmax.f32 %v1673, 0.0
    %v1706 = vmax.f32 %v1674, 0.0
    %v1707 = vmax.f32 %v1675, 0.0
    %v1708 = vmax.f32 %v1676, 0.0
    %v1709 = vmax.f32 %v1677, 0.0
    %v1710 = vmax.f32 %v1678, 0.0
    %v1711 = vmax.f32 %v1679, 0.0
    %v1712 = vmax.f32 %v1680, 0.0
    %v1713 = vmax.f32 %v1681, 0.0
    %v1714 = vmax.f32 %v1682, 0.0
    %v1715 = vmax.f32 %v1683, 0.0
    %v1716 = vmax.f32 %v1684, 0.0
    %v1717 = vmax.f32 %v1685, 0.0
    %v1718 = vmax.f32 %v1686, 0.0
    %v1719 = vmax.f32 %v1687, 0.0
    %v1720 = vmax.f32 %v1688, 0.0
    %v1721 = vmax.f32 %v1689, 0.0
    %v1722 = vmax.f32 %v1690, 0.0
    %v1723 = vmax.f32 %v1691, 0.0
    %v1724 = vmax.f32 %v1692, 0.0
    %v1725 = vmax.f32 %v1693, 0.0
    %v1726 = vmax.f32 %v1694, 0.0
    %v1727 = vmax.f32 %v1695, 0.0
    %v1728 = vmax.f32 %v1696, 0.0
    %v1729 = vmax.f32 %v1697, 0.0
    %v1730 = vmax.f32 %v1698, 0.0
    %v1731 = vmax.f32 %v1699, 0.0
    %v1732 = vmax.f32 %v1700, 0.0
    %v1733 = vmax.f32 %v1701, 0.0
    %v1734 = vmax.f32 %v1702, 0.0
    %v1735 = vpack.c.bf16 %v1704, %v1703
    %v1736 = vpack.c.bf16 %v1706, %v1705
    %v1737 = vpack.c.bf16 %v1708, %v1707
    %v1738 = vpack.c.bf16 %v1710, %v1709
    %v1739 = vpack.c.bf16 %v1712, %v1711
    %v1740 = vpack.c.bf16 %v1714, %v1713
    %v1741 = vpack.c.bf16 %v1716, %v1715
    %v1742 = vpack.c.bf16 %v1718, %v1717
    %v1743 = vpack.c.bf16 %v1720, %v1719
    %v1744 = vpack.c.bf16 %v1722, %v1721
    %v1745 = vpack.c.bf16 %v1724, %v1723
    %v1746 = vpack.c.bf16 %v1726, %v1725
    %v1747 = vpack.c.bf16 %v1728, %v1727
    %v1748 = vpack.c.bf16 %v1730, %v1729
    %v1749 = vpack.c.bf16 %v1732, %v1731
    %v1750 = vpack.c.bf16 %v1734, %v1733
    %v1751 = vld [vmem:[#allocation10] sm:$0xf]
    %v1752 = vld [vmem:[#allocation10 + $0x4] sm:$0xf]
    %v1753 = vld [vmem:[#allocation10 + $0x8] sm:$0xf]
    %v1754 = vld [vmem:[#allocation10 + $0xc] sm:$0xf]
    %v1755 = vld [vmem:[#allocation10 + $0x10] sm:$0xf]
    %v1756 = vld [vmem:[#allocation10 + $0x14] sm:$0xf]
    %v1757 = vld [vmem:[#allocation10 + $0x18] sm:$0xf]
    %v1758 = vld [vmem:[#allocation10 + $0x1c] sm:$0xf]
    %v1759 = vld [vmem:[#allocation10 + $0x20] sm:$0xf]
    %v1760 = vld [vmem:[#allocation10 + $0x24] sm:$0xf]
    %v1761 = vld [vmem:[#allocation10 + $0x28] sm:$0xf]
    %v1762 = vld [vmem:[#allocation10 + $0x2c] sm:$0xf]
    %v1763 = vld [vmem:[#allocation10 + $0x30] sm:$0xf]
    %v1764 = vld [vmem:[#allocation10 + $0x34] sm:$0xf]
    %v1765 = vld [vmem:[#allocation10 + $0x38] sm:$0xf]
    %v1766 = vld [vmem:[#allocation10 + $0x3c] sm:$0xf]
    %v1767 = vld [vmem:[%s7] sm:$0x1]
    %v1769 = vperm.slane %v1767, 0
    %v1787 = vunpack.c.l.b16 %v1751
    %v1788 = vunpack.c.l.b16 %v1752
    %v1789 = vunpack.c.l.b16 %v1753
    %v1790 = vunpack.c.l.b16 %v1754
    %v1791 = vunpack.c.l.b16 %v1755
    %v1792 = vunpack.c.l.b16 %v1756
    %v1793 = vunpack.c.l.b16 %v1757
    %v1794 = vunpack.c.l.b16 %v1758
    %v1795 = vunpack.c.l.b16 %v1759
    %v1796 = vunpack.c.l.b16 %v1760
    %v1797 = vunpack.c.l.b16 %v1761
    %v1798 = vunpack.c.l.b16 %v1762
    %v1799 = vunpack.c.l.b16 %v1763
    %v1800 = vunpack.c.l.b16 %v1764
    %v1801 = vunpack.c.l.b16 %v1765
    %v1802 = vunpack.c.l.b16 %v1766
    %v1803 = vpack.c.b16 %v1788, %v1787
    %v1804 = vpack.c.b16 %v1790, %v1789
    %v1805 = vpack.c.b16 %v1792, %v1791
    %v1806 = vpack.c.b16 %v1794, %v1793
    %v1807 = vpack.c.b16 %v1796, %v1795
    %v1808 = vpack.c.b16 %v1798, %v1797
    %v1809 = vpack.c.b16 %v1800, %v1799
    %v1810 = vpack.c.b16 %v1802, %v1801
    %1819 = vmatpush.bf16.msra.mxu0 %v1810
    %1820 = vmatpush.bf16.msra.mxu0 %v1809
    %1821 = vmatpush.bf16.msra.mxu0 %v1808
    %1822 = vmatpush.bf16.msra.mxu0 %v1807
    %1823 = vmatpush.bf16.msra.mxu0 %v1806
    %1824 = vmatpush.bf16.msra.mxu0 %v1805
    %1825 = vmatpush.bf16.msra.mxu0 %v1804
    %1826 = vmatpush.bf16.msra.mxu0 %v1803
    %1827 = vmatmul.bf16.gmra.mxu0 %v1735
    %v1828 = vpop.f32.mrf.mxu0
    %v1829 = vadd.f32 %v1769, %v1828
    %v1830 = vpop.f32.mrf.mxu0
    %v1831 = vadd.f32 %v1769, %v1830
    %1832 = vmatmul.bf16.gmra.mxu0 %v1736
    %v1833 = vpop.f32.mrf.mxu0
    %v1834 = vadd.f32 %v1769, %v1833
    %v1835 = vpop.f32.mrf.mxu0
    %v1836 = vadd.f32 %v1769, %v1835
    %1837 = vmatmul.bf16.gmra.mxu0 %v1737
    %v1838 = vpop.f32.mrf.mxu0
    %v1839 = vadd.f32 %v1769, %v1838
    %v1840 = vpop.f32.mrf.mxu0
    %v1841 = vadd.f32 %v1769, %v1840
    %1842 = vmatmul.bf16.gmra.mxu0 %v1738
    %v1843 = vpop.f32.mrf.mxu0
    %v1844 = vadd.f32 %v1769, %v1843
    %v1845 = vpop.f32.mrf.mxu0
    %v1846 = vadd.f32 %v1769, %v1845
    %1847 = vmatmul.bf16.gmra.mxu0 %v1739
    %v1848 = vpop.f32.mrf.mxu0
    %v1849 = vadd.f32 %v1769, %v1848
    %v1850 = vpop.f32.mrf.mxu0
    %v1851 = vadd.f32 %v1769, %v1850
    %1852 = vmatmul.bf16.gmra.mxu0 %v1740
    %v1853 = vpop.f32.mrf.mxu0
    %v1854 = vadd.f32 %v1769, %v1853
    %v1855 = vpop.f32.mrf.mxu0
    %v1856 = vadd.f32 %v1769, %v1855
    %1857 = vmatmul.bf16.gmra.mxu0 %v1741
    %v1858 = vpop.f32.mrf.mxu0
    %v1859 = vadd.f32 %v1769, %v1858
    %v1860 = vpop.f32.mrf.mxu0
    %v1861 = vadd.f32 %v1769, %v1860
    %1862 = vmatmul.bf16.gmra.mxu0 %v1742
    %v1863 = vpop.f32.mrf.mxu0
    %v1864 = vadd.f32 %v1769, %v1863
    %v1865 = vpop.f32.mrf.mxu0
    %v1866 = vadd.f32 %v1769, %v1865
    %1867 = vmatmul.bf16.gmra.mxu0 %v1743
    %v1868 = vpop.f32.mrf.mxu0
    %v1869 = vadd.f32 %v1769, %v1868
    %v1870 = vpop.f32.mrf.mxu0
    %v1871 = vadd.f32 %v1769, %v1870
    %1872 = vmatmul.bf16.gmra.mxu0 %v1744
    %v1873 = vpop.f32.mrf.mxu0
    %v1874 = vadd.f32 %v1769, %v1873
    %v1875 = vpop.f32.mrf.mxu0
    %v1876 = vadd.f32 %v1769, %v1875
    %1877 = vmatmul.bf16.gmra.mxu0 %v1745
    %v1878 = vpop.f32.mrf.mxu0
    %v1879 = vadd.f32 %v1769, %v1878
    %v1880 = vpop.f32.mrf.mxu0
    %v1881 = vadd.f32 %v1769, %v1880
    %1882 = vmatmul.bf16.gmra.mxu0 %v1746
    %v1883 = vpop.f32.mrf.mxu0
    %v1884 = vadd.f32 %v1769, %v1883
    %v1885 = vpop.f32.mrf.mxu0
    %v1886 = vadd.f32 %v1769, %v1885
    %1887 = vmatmul.bf16.gmra.mxu0 %v1747
    %v1888 = vpop.f32.mrf.mxu0
    %v1889 = vadd.f32 %v1769, %v1888
    %v1890 = vpop.f32.mrf.mxu0
    %v1891 = vadd.f32 %v1769, %v1890
    %1892 = vmatmul.bf16.gmra.mxu0 %v1748
    %v1893 = vpop.f32.mrf.mxu0
    %v1894 = vadd.f32 %v1769, %v1893
    %v1895 = vpop.f32.mrf.mxu0
    %v1896 = vadd.f32 %v1769, %v1895
    %1897 = vmatmul.bf16.gmra.mxu0 %v1749
    %v1898 = vpop.f32.mrf.mxu0
    %v1899 = vadd.f32 %v1769, %v1898
    %v1900 = vpop.f32.mrf.mxu0
    %v1901 = vadd.f32 %v1769, %v1900
    %1902 = vmatmul.bf16.gmra.mxu0 %v1750
    %v1903 = vpop.f32.mrf.mxu0
    %v1904 = vadd.f32 %v1769, %v1903
    %v1905 = vpop.f32.mrf.mxu0
    %v1906 = vadd.f32 %v1769, %v1905
    %1907 = vdwg.mxu0
    %1908 = vmax.xlane.f32.xlu0 %v1829
    %v1909 = vpop.xlane.xlu0 %1908
    %1910 = vmax.xlane.f32.xlu0 %v1831
    %v1911 = vpop.xlane.xlu0 %1910
    %1912 = vmax.xlane.f32.xlu0 %v1834
    %v1913 = vpop.xlane.xlu0 %1912
    %1914 = vmax.xlane.f32.xlu0 %v1836
    %v1915 = vpop.xlane.xlu0 %1914
    %1916 = vmax.xlane.f32.xlu0 %v1839
    %v1917 = vpop.xlane.xlu0 %1916
    %1918 = vmax.xlane.f32.xlu0 %v1841
    %v1919 = vpop.xlane.xlu0 %1918
    %1920 = vmax.xlane.f32.xlu0 %v1844
    %v1921 = vpop.xlane.xlu0 %1920
    %1922 = vmax.xlane.f32.xlu0 %v1846
    %v1923 = vpop.xlane.xlu0 %1922
    %1924 = vmax.xlane.f32.xlu0 %v1849
    %v1925 = vpop.xlane.xlu0 %1924
    %1926 = vmax.xlane.f32.xlu0 %v1851
    %v1927 = vpop.xlane.xlu0 %1926
    %1928 = vmax.xlane.f32.xlu0 %v1854
    %v1929 = vpop.xlane.xlu0 %1928
    %1930 = vmax.xlane.f32.xlu0 %v1856
    %v1931 = vpop.xlane.xlu0 %1930
    %1932 = vmax.xlane.f32.xlu0 %v1859
    %v1933 = vpop.xlane.xlu0 %1932
    %1934 = vmax.xlane.f32.xlu0 %v1861
    %v1935 = vpop.xlane.xlu0 %1934
    %1936 = vmax.xlane.f32.xlu0 %v1864
    %v1937 = vpop.xlane.xlu0 %1936
    %1938 = vmax.xlane.f32.xlu0 %v1866
    %v1939 = vpop.xlane.xlu0 %1938
    %1940 = vmax.xlane.f32.xlu0 %v1869
    %v1941 = vpop.xlane.xlu0 %1940
    %1942 = vmax.xlane.f32.xlu0 %v1871
    %v1943 = vpop.xlane.xlu0 %1942
    %1944 = vmax.xlane.f32.xlu0 %v1874
    %v1945 = vpop.xlane.xlu0 %1944
    %1946 = vmax.xlane.f32.xlu0 %v1876
    %v1947 = vpop.xlane.xlu0 %1946
    %1948 = vmax.xlane.f32.xlu0 %v1879
    %v1949 = vpop.xlane.xlu0 %1948
    %1950 = vmax.xlane.f32.xlu0 %v1881
    %v1951 = vpop.xlane.xlu0 %1950
    %1952 = vmax.xlane.f32.xlu0 %v1884
    %v1953 = vpop.xlane.xlu0 %1952
    %1954 = vmax.xlane.f32.xlu0 %v1886
    %v1955 = vpop.xlane.xlu0 %1954
    %1956 = vmax.xlane.f32.xlu0 %v1889
    %v1957 = vpop.xlane.xlu0 %1956
    %1958 = vmax.xlane.f32.xlu0 %v1891
    %v1959 = vpop.xlane.xlu0 %1958
    %1960 = vmax.xlane.f32.xlu0 %v1894
    %v1961 = vpop.xlane.xlu0 %1960
    %1962 = vmax.xlane.f32.xlu0 %v1896
    %v1963 = vpop.xlane.xlu0 %1962
    %1964 = vmax.xlane.f32.xlu0 %v1899
    %v1965 = vpop.xlane.xlu0 %1964
    %1966 = vmax.xlane.f32.xlu0 %v1901
    %v1967 = vpop.xlane.xlu0 %1966
    %1968 = vmax.xlane.f32.xlu0 %v1904
    %v1969 = vpop.xlane.xlu0 %1968
    %1970 = vmax.xlane.f32.xlu0 %v1906
    %v1971 = vpop.xlane.xlu0 %1970
    %v1972 = vsub.f32 %v1829, %v1909
    %v1973 = vsub.f32 %v1831, %v1911
    %v1974 = vsub.f32 %v1834, %v1913
    %v1975 = vsub.f32 %v1836, %v1915
    %v1976 = vsub.f32 %v1839, %v1917
    %v1977 = vsub.f32 %v1841, %v1919
    %v1978 = vsub.f32 %v1844, %v1921
    %v1979 = vsub.f32 %v1846, %v1923
    %v1980 = vsub.f32 %v1849, %v1925
    %v1981 = vsub.f32 %v1851, %v1927
    %v1982 = vsub.f32 %v1854, %v1929
    %v1983 = vsub.f32 %v1856, %v1931
    %v1984 = vsub.f32 %v1859, %v1933
    %v1985 = vsub.f32 %v1861, %v1935
    %v1986 = vsub.f32 %v1864, %v1937
    %v1987 = vsub.f32 %v1866, %v1939
    %v1988 = vsub.f32 %v1869, %v1941
    %v1989 = vsub.f32 %v1871, %v1943
    %v1990 = vsub.f32 %v1874, %v1945
    %v1991 = vsub.f32 %v1876, %v1947
    %v1992 = vsub.f32 %v1879, %v1949
    %v1993 = vsub.f32 %v1881, %v1951
    %v1994 = vsub.f32 %v1884, %v1953
    %v1995 = vsub.f32 %v1886, %v1955
    %v1996 = vsub.f32 %v1889, %v1957
    %v1997 = vsub.f32 %v1891, %v1959
    %v1998 = vsub.f32 %v1894, %v1961
    %v1999 = vsub.f32 %v1896, %v1963
    %v2000 = vsub.f32 %v1899, %v1965
    %v2001 = vsub.f32 %v1901, %v1967
    %v2002 = vsub.f32 %v1904, %v1969
    %v2003 = vsub.f32 %v1906, %v1971
    %v2004 = vmul.f32 %v1972, 1.442695
    %v2005 = vpow.pop %v2004
    %v2006 = vmul.f32 %v1973, 1.442695
    %v2007 = vpow.pop %v2006
    %v2008 = vmul.f32 %v1974, 1.442695
    %v2009 = vpow.pop %v2008
    %v2010 = vmul.f32 %v1975, 1.442695
    %v2011 = vpow.pop %v2010
    %v2012 = vmul.f32 %v1976, 1.442695
    %v2013 = vpow.pop %v2012
    %v2014 = vmul.f32 %v1977, 1.442695
    %v2015 = vpow.pop %v2014
    %v2016 = vmul.f32 %v1978, 1.442695
    %v2017 = vpow.pop %v2016
    %v2018 = vmul.f32 %v1979, 1.442695
    %v2019 = vpow.pop %v2018
    %v2020 = vmul.f32 %v1980, 1.442695
    %v2021 = vpow.pop %v2020
    %v2022 = vmul.f32 %v1981, 1.442695
    %v2023 = vpow.pop %v2022
    %v2024 = vmul.f32 %v1982, 1.442695
    %v2025 = vpow.pop %v2024
    %v2026 = vmul.f32 %v1983, 1.442695
    %v2027 = vpow.pop %v2026
    %v2028 = vmul.f32 %v1984, 1.442695
    %v2029 = vpow.pop %v2028
    %v2030 = vmul.f32 %v1985, 1.442695
    %v2031 = vpow.pop %v2030
    %v2032 = vmul.f32 %v1986, 1.442695
    %v2033 = vpow.pop %v2032
    %v2034 = vmul.f32 %v1987, 1.442695
    %v2035 = vpow.pop %v2034
    %v2036 = vmul.f32 %v1988, 1.442695
    %v2037 = vpow.pop %v2036
    %v2038 = vmul.f32 %v1989, 1.442695
    %v2039 = vpow.pop %v2038
    %v2040 = vmul.f32 %v1990, 1.442695
    %v2041 = vpow.pop %v2040
    %v2042 = vmul.f32 %v1991, 1.442695
    %v2043 = vpow.pop %v2042
    %v2044 = vmul.f32 %v1992, 1.442695
    %v2045 = vpow.pop %v2044
    %v2046 = vmul.f32 %v1993, 1.442695
    %v2047 = vpow.pop %v2046
    %v2048 = vmul.f32 %v1994, 1.442695
    %v2049 = vpow.pop %v2048
    %v2050 = vmul.f32 %v1995, 1.442695
    %v2051 = vpow.pop %v2050
    %v2052 = vmul.f32 %v1996, 1.442695
    %v2053 = vpow.pop %v2052
    %v2054 = vmul.f32 %v1997, 1.442695
    %v2055 = vpow.pop %v2054
    %v2056 = vmul.f32 %v1998, 1.442695
    %v2057 = vpow.pop %v2056
    %v2058 = vmul.f32 %v1999, 1.442695
    %v2059 = vpow.pop %v2058
    %v2060 = vmul.f32 %v2000, 1.442695
    %v2061 = vpow.pop %v2060
    %v2062 = vmul.f32 %v2001, 1.442695
    %v2063 = vpow.pop %v2062
    %v2064 = vmul.f32 %v2002, 1.442695
    %v2065 = vpow.pop %v2064
    %v2066 = vmul.f32 %v2003, 1.442695
    %v2067 = vpow.pop %v2066
    %2068 = vadd.xlane.f32.xlu0 %v2005
    %v2069 = vpop.xlane.xlu0 %2068
    %2070 = vadd.xlane.f32.xlu0 %v2007
    %v2071 = vpop.xlane.xlu0 %2070
    %2072 = vadd.xlane.f32.xlu0 %v2009
    %v2073 = vpop.xlane.xlu0 %2072
    %2074 = vadd.xlane.f32.xlu0 %v2011
    %v2075 = vpop.xlane.xlu0 %2074
    %2076 = vadd.xlane.f32.xlu0 %v2013
    %v2077 = vpop.xlane.xlu0 %2076
    %2078 = vadd.xlane.f32.xlu0 %v2015
    %v2079 = vpop.xlane.xlu0 %2078
    %2080 = vadd.xlane.f32.xlu0 %v2017
    %v2081 = vpop.xlane.xlu0 %2080
    %2082 = vadd.xlane.f32.xlu0 %v2019
    %v2083 = vpop.xlane.xlu0 %2082
    %2084 = vadd.xlane.f32.xlu0 %v2021
    %v2085 = vpop.xlane.xlu0 %2084
    %2086 = vadd.xlane.f32.xlu0 %v2023
    %v2087 = vpop.xlane.xlu0 %2086
    %2088 = vadd.xlane.f32.xlu0 %v2025
    %v2089 = vpop.xlane.xlu0 %2088
    %2090 = vadd.xlane.f32.xlu0 %v2027
    %v2091 = vpop.xlane.xlu0 %2090
    %2092 = vadd.xlane.f32.xlu0 %v2029
    %v2093 = vpop.xlane.xlu0 %2092
    %2094 = vadd.xlane.f32.xlu0 %v2031
    %v2095 = vpop.xlane.xlu0 %2094
    %2096 = vadd.xlane.f32.xlu0 %v2033
    %v2097 = vpop.xlane.xlu0 %2096
    %2098 = vadd.xlane.f32.xlu0 %v2035
    %v2099 = vpop.xlane.xlu0 %2098
    %2100 = vadd.xlane.f32.xlu0 %v2037
    %v2101 = vpop.xlane.xlu0 %2100
    %2102 = vadd.xlane.f32.xlu0 %v2039
    %v2103 = vpop.xlane.xlu0 %2102
    %2104 = vadd.xlane.f32.xlu0 %v2041
    %v2105 = vpop.xlane.xlu0 %2104
    %2106 = vadd.xlane.f32.xlu0 %v2043
    %v2107 = vpop.xlane.xlu0 %2106
    %2108 = vadd.xlane.f32.xlu0 %v2045
    %v2109 = vpop.xlane.xlu0 %2108
    %2110 = vadd.xlane.f32.xlu0 %v2047
    %v2111 = vpop.xlane.xlu0 %2110
    %2112 = vadd.xlane.f32.xlu0 %v2049
    %v2113 = vpop.xlane.xlu0 %2112
    %2114 = vadd.xlane.f32.xlu0 %v2051
    %v2115 = vpop.xlane.xlu0 %2114
    %2116 = vadd.xlane.f32.xlu0 %v2053
    %v2117 = vpop.xlane.xlu0 %2116
    %2118 = vadd.xlane.f32.xlu0 %v2055
    %v2119 = vpop.xlane.xlu0 %2118
    %2120 = vadd.xlane.f32.xlu0 %v2057
    %v2121 = vpop.xlane.xlu0 %2120
    %2122 = vadd.xlane.f32.xlu0 %v2059
    %v2123 = vpop.xlane.xlu0 %2122
    %2124 = vadd.xlane.f32.xlu0 %v2061
    %v2125 = vpop.xlane.xlu0 %2124
    %2126 = vadd.xlane.f32.xlu0 %v2063
    %v2127 = vpop.xlane.xlu0 %2126
    %2128 = vadd.xlane.f32.xlu0 %v2065
    %v2129 = vpop.xlane.xlu0 %2128
    %2130 = vadd.xlane.f32.xlu0 %v2067
    %v2131 = vpop.xlane.xlu0 %2130
    %v2132 = vrcp.pop %v2069
    %v2133 = vrcp.pop %v2071
    %v2134 = vrcp.pop %v2073
    %v2135 = vrcp.pop %v2075
    %v2136 = vrcp.pop %v2077
    %v2137 = vrcp.pop %v2079
    %v2138 = vrcp.pop %v2081
    %v2139 = vrcp.pop %v2083
    %v2140 = vrcp.pop %v2085
    %v2141 = vrcp.pop %v2087
    %v2142 = vrcp.pop %v2089
    %v2143 = vrcp.pop %v2091
    %v2144 = vrcp.pop %v2093
    %v2145 = vrcp.pop %v2095
    %v2146 = vrcp.pop %v2097
    %v2147 = vrcp.pop %v2099
    %v2148 = vrcp.pop %v2101
    %v2149 = vrcp.pop %v2103
    %v2150 = vrcp.pop %v2105
    %v2151 = vrcp.pop %v2107
    %v2152 = vrcp.pop %v2109
    %v2153 = vrcp.pop %v2111
    %v2154 = vrcp.pop %v2113
    %v2155 = vrcp.pop %v2115
    %v2156 = vrcp.pop %v2117
    %v2157 = vrcp.pop %v2119
    %v2158 = vrcp.pop %v2121
    %v2159 = vrcp.pop %v2123
    %v2160 = vrcp.pop %v2125
    %v2161 = vrcp.pop %v2127
    %v2162 = vrcp.pop %v2129
    %v2163 = vrcp.pop %v2131
    %v2164 = vmul.f32 %v2005, %v2132
    %v2165 = vmul.f32 %v2007, %v2133
    %v2166 = vmul.f32 %v2009, %v2134
    %v2167 = vmul.f32 %v2011, %v2135
    %v2168 = vmul.f32 %v2013, %v2136
    %v2169 = vmul.f32 %v2015, %v2137
    %v2170 = vmul.f32 %v2017, %v2138
    %v2171 = vmul.f32 %v2019, %v2139
    %v2172 = vmul.f32 %v2021, %v2140
    %v2173 = vmul.f32 %v2023, %v2141
    %v2174 = vmul.f32 %v2025, %v2142
    %v2175 = vmul.f32 %v2027, %v2143
    %v2176 = vmul.f32 %v2029, %v2144
    %v2177 = vmul.f32 %v2031, %v2145
    %v2178 = vmul.f32 %v2033, %v2146
    %v2179 = vmul.f32 %v2035, %v2147
    %v2180 = vmul.f32 %v2037, %v2148
    %v2181 = vmul.f32 %v2039, %v2149
    %v2182 = vmul.f32 %v2041, %v2150
    %v2183 = vmul.f32 %v2043, %v2151
    %v2184 = vmul.f32 %v2045, %v2152
    %v2185 = vmul.f32 %v2047, %v2153
    %v2186 = vmul.f32 %v2049, %v2154
    %v2187 = vmul.f32 %v2051, %v2155
    %v2188 = vmul.f32 %v2053, %v2156
    %v2189 = vmul.f32 %v2055, %v2157
    %v2190 = vmul.f32 %v2057, %v2158
    %v2191 = vmul.f32 %v2059, %v2159
    %v2192 = vmul.f32 %v2061, %v2160
    %v2193 = vmul.f32 %v2063, %v2161
    %v2194 = vmul.f32 %v2065, %v2162
    %v2195 = vmul.f32 %v2067, %v2163
    %2196 = vst [vmem:[#allocation11] sm:$0xff] %v2164
    %2197 = vst [vmem:[#allocation11 + $0x8] sm:$0xff] %v2165
    %2198 = vst [vmem:[#allocation11 + $0x10] sm:$0xff] %v2166
    %2199 = vst [vmem:[#allocation11 + $0x18] sm:$0xff] %v2167
    %2200 = vst [vmem:[#allocation11 + $0x20] sm:$0xff] %v2168
    %2201 = vst [vmem:[#allocation11 + $0x28] sm:$0xff] %v2169
    %2202 = vst [vmem:[#allocation11 + $0x30] sm:$0xff] %v2170
    %2203 = vst [vmem:[#allocation11 + $0x38] sm:$0xff] %v2171
    %2204 = vst [vmem:[#allocation11 + $0x40] sm:$0xff] %v2172
    %2205 = vst [vmem:[#allocation11 + $0x48] sm:$0xff] %v2173
    %2206 = vst [vmem:[#allocation11 + $0x50] sm:$0xff] %v2174
    %2207 = vst [vmem:[#allocation11 + $0x58] sm:$0xff] %v2175
    %2208 = vst [vmem:[#allocation11 + $0x60] sm:$0xff] %v2176
    %2209 = vst [vmem:[#allocation11 + $0x68] sm:$0xff] %v2177
    %2210 = vst [vmem:[#allocation11 + $0x70] sm:$0xff] %v2178
    %2211 = vst [vmem:[#allocation11 + $0x78] sm:$0xff] %v2179
    %2212 = vst [vmem:[#allocation11 + $0x80] sm:$0xff] %v2180
    %2213 = vst [vmem:[#allocation11 + $0x88] sm:$0xff] %v2181
    %2214 = vst [vmem:[#allocation11 + $0x90] sm:$0xff] %v2182
    %2215 = vst [vmem:[#allocation11 + $0x98] sm:$0xff] %v2183
    %2216 = vst [vmem:[#allocation11 + $0xa0] sm:$0xff] %v2184
    %2217 = vst [vmem:[#allocation11 + $0xa8] sm:$0xff] %v2185
    %2218 = vst [vmem:[#allocation11 + $0xb0] sm:$0xff] %v2186
    %2219 = vst [vmem:[#allocation11 + $0xb8] sm:$0xff] %v2187
    %2220 = vst [vmem:[#allocation11 + $0xc0] sm:$0xff] %v2188
    %2221 = vst [vmem:[#allocation11 + $0xc8] sm:$0xff] %v2189
    %2222 = vst [vmem:[#allocation11 + $0xd0] sm:$0xff] %v2190
    %2223 = vst [vmem:[#allocation11 + $0xd8] sm:$0xff] %v2191
    %2224 = vst [vmem:[#allocation11 + $0xe0] sm:$0xff] %v2192
    %2225 = vst [vmem:[#allocation11 + $0xe8] sm:$0xff] %v2193
    %2226 = vst [vmem:[#allocation11 + $0xf0] sm:$0xff] %v2194
    %2227 = vst [vmem:[#allocation11 + $0xf8] sm:$0xff] %v2195
    // Predicated region
    $region54: #{tpu_custom_call.1} parent=1 // pred_check
      _
    $region55: #{tpu_custom_call.1} parent=1 // pred_check_branch
      %2229 = sbr.rel (0) target = $region57
    $region56: #{tpu_custom_call.1} parent=1 // pred_region
      %2231 = vsyncadd [#allocation4], 0
      %s2232 = sshll.u32 [#allocation11], 4
      %s2233 = int_to_ptr.vmem [resolvable:$true] %s2232
      %s2234 = sshll.u32 %s8, 4
      %s2235 = int_to_ptr.hbm [resolvable:$true] %s2234
      %2240 = dma.vmem_to_hbm [thread:$0]  %s2233, 4096, %s2235, [#allocation4], 128, 128, 8
    $region57: #{tpu_custom_call.1} parent=1 // pred_fallthru
      _
    // Predicated region
    $region58: #{tpu_custom_call.1} parent=1 // pred_check
      _
    $region59: #{tpu_custom_call.1} parent=1 // pred_check_branch
      %2242 = sbr.rel (0) target = $region61
    $region60: #{tpu_custom_call.1} parent=1 // pred_region
      %2244 = dma.done [#allocation4], 4096
    $region61: #{tpu_custom_call.1} parent=1 // pred_fallthru
      _
    %2245 = vsyncpa [#allocation3], 1
    %2246 = vsyncpa [#allocation6], 1
    %2247 = vsyncpa [#allocation9], 1
    %2248 = vsyncpa [#allocation4], 1

</llo_original>
